<compile_context>
chip_gen: v7x
topology: tpu7x:2x2x1
jax: 0.10.0
libtpu: 0.0.40
codegen_flags: <defaults>
</compile_context>

<pallas_src>
import functools
import math

import jax
import jax.numpy as jnp
from jax.experimental import pallas as pl
from jax.experimental.pallas import tpu as pltpu

NEG_INF = -1e30  # finite "minus infinity": avoids inf-inf NaNs, exp underflows to 0


def _round_up(x, m):
    return (x + m - 1) // m * m


def _vmem_bytes(*specs):
    """Rough VMEM accounting: (shape, dtype, n_buffers) triples."""
    total = 0
    for shape, dtype, nbuf in specs:
        total += nbuf * math.prod(shape) * jnp.dtype(dtype).itemsize
    return total


def _row_to_col(row):
    """(1, N) -> (N, 1) using broadcast + select + lane reduce.

    One transform per grid step; one vreg of VPU work at decode batch sizes
    (avoids relying on a sub-tile 2-D transpose lowering)."""
    n = row.shape[1]
    rows = jax.lax.broadcasted_iota(jnp.int32, (n, n), 0)
    cols = jax.lax.broadcasted_iota(jnp.int32, (n, n), 1)
    return jnp.sum(jnp.where(rows == cols, row, 0.0), axis=1, keepdims=True)


# ----------------------------------------------------------------------------
# Kernel A: additive attention (streamed over src_len, online softmax) + GRU
# ----------------------------------------------------------------------------
def attn_gru_kernel(
    s_real, s_tile, mask_needed,   # bound via functools.partial (Python ints/bool)
    emb_ref,     # (Bp, E)  f32    embedded token (dropout = eval identity)
    hid_ref,     # (Bp, Hp) f32    previous decoder hidden (zero-padded)
    enc_ref,     # (TS, Bp, D2) bf16  one src tile, seq-major (no HBM transpose)
    wa_h_ref,    # (Hp, Ap) f32    attention weights, decoder-hidden rows
    wa_e_ref,    # (D2, Ap) bf16   attention weights, encoder-output rows
    ba_ref,      # (1, Ap)  f32    attention bias
    wih_e_ref,   # (3, E, Hp)  bf16  per-gate [r,z,n] input->hidden, embedded part
    wih_w_ref,   # (3, D2, Hp) bf16  per-gate input->hidden, weighted-encoder part
    whh_ref,     # (3, Hp, Hp) bf16  per-gate hidden->hidden
    bi_ref,      # (3, 1, Hp) f32
    bh_ref,      # (3, 1, Hp) f32
    hnew_ref,    # (Bp, Hp) f32 out
    wgt_ref,     # (Bp, D2) f32 out (weighted encoder representation)
    eh_sc,       # (Bp, Ap) f32 scratch: hidden attention term (+bias), computed once
    m_sc,        # (1, Bp)  f32 scratch: running softmax max
    l_sc,        # (1, Bp)  f32 scratch: running softmax denominator
    acc_sc,      # (Bp, D2) f32 scratch: unnormalized weighted encoder rep
):
    s = pl.program_id(0)

    @pl.when(s == 0)
    def _init():
        # Fold the attention bias into the hidden-state term once.
        eh_sc[...] = (
            jnp.dot(hid_ref[...], wa_h_ref[...], preferred_element_type=jnp.float32)
            + ba_ref[...]
        )
        m_sc[...] = jnp.full_like(m_sc, NEG_INF)
        l_sc[...] = jnp.zeros_like(l_sc)
        acc_sc[...] = jnp.zeros_like(acc_sc)

    enc = enc_ref[...]                       # (TS, Bp, D2) bf16
    ts, bp, d2 = enc.shape

    # energy = tanh([h ; enc] @ Wa + ba), as two dots (no concatenation).
    # NOTE: for D2 % 128 != 0 the reshape may materialize a VMEM copy per tile;
    # at production enc_hid (D2 >= 128) it is free.
    e_e = jnp.dot(
        enc.reshape(ts * bp, d2), wa_e_ref[...], preferred_element_type=jnp.float32
    ).reshape(ts, bp, -1)                                          # (TS, Bp, Ap)
    energy = jnp.tanh(eh_sc[...][None, :, :] + e_e)                # (TS, Bp, Ap)
    scores = jnp.sum(energy, axis=2)                               # (TS, Bp)

    if mask_needed:
        # Mask rows past the true src_len (src was zero-padded to a tile multiple).
        row_ids = jax.lax.broadcasted_iota(jnp.int32, (ts, bp), 0) + s * s_tile
        scores = jnp.where(row_ids < s_real, scores, NEG_INF)

    # Online softmax over the src_len grid axis.
    m_prev = m_sc[...]
    m_new = jnp.maximum(m_prev, jnp.max(scores, axis=0, keepdims=True))  # (1, Bp)
    alpha = jnp.exp(m_prev - m_new)                                      # (1, Bp)
    p = jnp.exp(scores - m_new)                                          # (TS, Bp)
    l_sc[...] = alpha * l_sc[...] + jnp.sum(p, axis=0, keepdims=True)
    acc_sc[...] = acc_sc[...] * _row_to_col(alpha) + jnp.sum(p[:, :, None] * enc, axis=0)
    m_sc[...] = m_new

    @pl.when(s == pl.num_programs(0) - 1)
    def _finalize():
        # Exact normalization (feeds the recurrent state; no approx reciprocal).
        l_col = _row_to_col(l_sc[...])                               # (Bp, 1)
        weighted = acc_sc[...] / l_col                               # (Bp, D2) f32

        emb_b = emb_ref[...].astype(jnp.bfloat16)
        h = hid_ref[...]
        h_b = h.astype(jnp.bfloat16)
        w_b = weighted.astype(jnp.bfloat16)

        # GRU cell, PyTorch gate order [r, z, n]; per-gate dots, no concat/slice.
        def gi(g):
            return (jnp.dot(emb_b, wih_e_ref[g], preferred_element_type=jnp.float32)
                    + jnp.dot(w_b, wih_w_ref[g], preferred_element_type=jnp.float32)
                    + bi_ref[g])

        def gh(g):
            return jnp.dot(h_b, whh_ref[g], preferred_element_type=jnp.float32) + bh_ref[g]

        r = jax.nn.sigmoid(gi(0) + gh(0))
        z = jax.nn.sigmoid(gi(1) + gh(1))
        n = jnp.tanh(gi(2) + r * gh(2))
        hnew_ref[...] = (1.0 - z) * n + z * h
        wgt_ref[...] = weighted


# ----------------------------------------------------------------------------
# Kernel B: output (vocab) projection — ONE dot per lane-dense column tile
# ----------------------------------------------------------------------------
def out_proj_kernel(act_ref, w_ref, bo_ref, logits_ref):
    logits_ref[...] = (
        jnp.dot(act_ref[...], w_ref[...], preferred_element_type=jnp.float32)
        + bo_ref[...]
    ).astype(logits_ref.dtype)


# ----------------------------------------------------------------------------
# Wrapper: parameter prep (per-gate split, bf16 streams, pad to TPU tiles)
# ----------------------------------------------------------------------------
def prepare_params(params, emb_dim, enc_hid_dim, dec_hid_dim, attn_dim, output_dim):
    E, D2, H, A, O = emb_dim, 2 * enc_hid_dim, dec_hid_dim, attn_dim, output_dim
    Hp = _round_up(H, 128)
    Ap = _round_up(A, 128)   # lane-dense energy/score path; zero columns are inert
    f32, bf16 = jnp.float32, jnp.bfloat16

    def split_gates(w):  # (..., 3H) -> [(.., H)] * 3  (gate order r, z, n)
        return [w[..., g * H:(g + 1) * H] for g in range(3)]

    w_ih, w_hh = params["w_ih"], params["w_hh"]
    b_ih, b_hh = params["b_ih"], params["b_hh"]

    wih_e = jnp.stack([jnp.pad(g[:E], ((0, 0), (0, Hp - H)))
                       for g in split_gates(w_ih)]).astype(bf16)
    wih_w = jnp.stack([jnp.pad(g[E:], ((0, 0), (0, Hp - H)))
                       for g in split_gates(w_ih)]).astype(bf16)
    whh = jnp.stack([jnp.pad(g, ((0, Hp - H), (0, Hp - H)))
                     for g in split_gates(w_hh)]).astype(bf16)
    bi = jnp.stack([jnp.pad(g, ((0, 0), (0, Hp - H))) for g in split_gates(b_ih)]).astype(f32)
    bh = jnp.stack([jnp.pad(g, ((0, 0), (0, Hp - H))) for g in split_gates(b_hh)]).astype(f32)

    wa_h = jnp.pad(params["wa_h"], ((0, Hp - H), (0, Ap - A))).astype(f32)    # (Hp, Ap)
    wa_e = jnp.pad(params["wa_e"], ((0, 0), (0, Ap - A))).astype(bf16)        # (D2, Ap)
    ba = jnp.pad(params["ba"], ((0, 0), (0, Ap - A))).astype(f32)             # (1, Ap)

    # Single concatenated output-projection matrix (rows: [Hp | D2 | E], padded
    # to Kp % 8 == 0), streamed in bf16, columns padded to a `to` multiple.
    K = Hp + D2 + E
    Kp = _round_up(K, 8)
    to_cap = max(128, ((8 << 20) // (4 * Kp)) // 128 * 128)   # double-buffered bf16 w tile
    to = min(_round_up(O, 128), to_cap, 2048)
    Op = _round_up(O, to)
    # NOTE(v7x): for large vocabularies Op/to yields >=2 tiles, so the 'parallel'
    # grid axis shards across both TensorCores; tiny demo vocab stays 1 tile.

    w_out = params["w_out"]                                       # (H+D2+E, O)
    w_h = jnp.pad(w_out[:H], ((0, Hp - H), (0, 0)))               # (Hp, O)
    w_cat = jnp.concatenate([w_h, w_out[H:H + D2], w_out[H + D2:]], axis=0)   # (K, O)
    w_cat = jnp.pad(w_cat, ((0, Kp - K), (0, Op - O))).astype(bf16)           # (Kp, Op)
    bo = jnp.pad(params["b_out"], ((0, 0), (0, Op - O))).astype(f32)          # (1, Op)

    return dict(
        embedding=params["embedding"],
        wa_h=wa_h, wa_e=wa_e, ba=ba,
        wih_e=wih_e, wih_w=wih_w, whh=whh, bi=bi, bh=bh,
        w_out_cat=w_cat, bo=bo,
        dims=dict(E=E, D2=D2, H=H, Hp=Hp, A=A, Ap=Ap, O=O, Op=Op, K=K, Kp=Kp, to=to),
    )


def decoder_forward(kp, input_tokens, decoder_hidden, encoder_outputs, *, s_tile=None):
    """
    input_tokens:    (B,) int32
    decoder_hidden:  (B, dec_hid) float32
    encoder_outputs: (src_len, B, 2*enc_hid) float32  (PyTorch layout, NOT transposed)
    returns: (logits (B, output_dim), new_hidden (B, dec_hid))
    """
    d = kp["dims"]
    E, D2, H, Hp, Ap = d["E"], d["D2"], d["H"], d["Hp"], d["Ap"]
    O, Op, K, Kp, to = d["O"], d["Op"], d["K"], d["Kp"], d["to"]
    B = input_tokens.shape[0]
    S = encoder_outputs.shape[0]
    assert encoder_outputs.shape[1] == B and encoder_outputs.shape[2] == D2
    Bp = _round_up(B, 8)

    # Glue: embedding gather + eval-mode dropout (identity) + zero padding.
    embedded = kp["embedding"][input_tokens]                       # (B, E)
    emb_p = jnp.pad(embedded, ((0, Bp - B), (0, 0)))               # (Bp, E)
    hid_p = jnp.pad(decoder_hidden, ((0, Bp - B), (0, Hp - H)))    # (Bp, Hp)

    # src tile sized from a VMEM budget (fewer grid steps / rescales / DMAs).
    if s_tile is None:
        enc_row_bytes = Bp * D2 * 2                                # bf16 row
        cap = max(8, ((12 << 20) // (2 * enc_row_bytes)) // 8 * 8)
        s_tile = min(_round_up(S, 8), cap, 1024)
    assert s_tile % 8 == 0 and s_tile >= 8
    Sp = _round_up(S, s_tile)
    n_s = Sp // s_tile

    # bf16 encoder stream (halves the dominant HBM traffic); padded rows are
    # masked to -inf scores in-kernel, padded batch columns are sliced off later.
    enc_p = jnp.pad(encoder_outputs.astype(jnp.bfloat16),
                    ((0, Sp - S), (0, Bp - B), (0, 0)))            # (Sp, Bp, D2)

    vmem_a = _vmem_bytes(
        ((Bp, E), jnp.float32, 2), ((Bp, Hp), jnp.float32, 2),
        ((s_tile, Bp, D2), jnp.bfloat16, 2),
        ((Hp, Ap), jnp.float32, 2), ((D2, Ap), jnp.bfloat16, 2), ((1, Ap), jnp.float32, 2),
        ((3, E, Hp), jnp.bfloat16, 2), ((3, D2, Hp), jnp.bfloat16, 2),
        ((3, Hp, Hp), jnp.bfloat16, 2),
        ((3, 1, Hp), jnp.float32, 2), ((3, 1, Hp), jnp.float32, 2),
        ((Bp, Hp), jnp.float32, 2), ((Bp, D2), jnp.float32, 2),
        ((Bp, Ap), jnp.float32, 1), ((1, Bp), jnp.float32, 2), ((Bp, D2), jnp.float32, 1),
    )
    vmem_a = min(max(2 * vmem_a + (4 << 20), 16 << 20), 60 << 20)

    # ---- Kernel A: attention (streamed over src_len) + GRU ------------------
    kern_a = functools.partial(attn_gru_kernel, S, s_tile, Sp != S)
    h_new_p, weighted_p = pl.pallas_call(
        kern_a,
        out_shape=(
            jax.ShapeDtypeStruct((Bp, Hp), jnp.float32),
            jax.ShapeDtypeStruct((Bp, D2), jnp.float32),
        ),
        grid_spec=pltpu.PrefetchScalarGridSpec(
            num_scalar_prefetch=0,
            grid=(n_s,),
            in_specs=[
                pl.BlockSpec((Bp, E), lambda s: (0, 0)),
                pl.BlockSpec((Bp, Hp), lambda s: (0, 0)),
                pl.BlockSpec((s_tile, Bp, D2), lambda s: (s, 0, 0)),
                pl.BlockSpec((Hp, Ap), lambda s: (0, 0)),
                pl.BlockSpec((D2, Ap), lambda s: (0, 0)),
                pl.BlockSpec((1, Ap), lambda s: (0, 0)),
                pl.BlockSpec((3, E, Hp), lambda s: (0, 0, 0)),
                pl.BlockSpec((3, D2, Hp), lambda s: (0, 0, 0)),
                pl.BlockSpec((3, Hp, Hp), lambda s: (0, 0, 0)),
                pl.BlockSpec((3, 1, Hp), lambda s: (0, 0, 0)),
                pl.BlockSpec((3, 1, Hp), lambda s: (0, 0, 0)),
            ],
            out_specs=(
                pl.BlockSpec((Bp, Hp), lambda s: (0, 0)),
                pl.BlockSpec((Bp, D2), lambda s: (0, 0)),
            ),
            scratch_shapes=[
                pltpu.VMEM((Bp, Ap), jnp.float32),   # eh_sc
                pltpu.VMEM((1, Bp), jnp.float32),    # m_sc
                pltpu.VMEM((1, Bp), jnp.float32),    # l_sc
                pltpu.VMEM((Bp, D2), jnp.float32),   # acc_sc
            ],
        ),
        compiler_params=pltpu.CompilerParams(
            dimension_semantics=("arbitrary",),
            vmem_limit_bytes=vmem_a,
        ),
    )(
        emb_p, hid_p, enc_p,
        kp["wa_h"], kp["wa_e"], kp["ba"],
        kp["wih_e"], kp["wih_w"], kp["whh"], kp["bi"], kp["bh"],
    )

    # ---- Kernel B: vocab projection, single dot per lane-dense O tile -------
    cat = jnp.concatenate([h_new_p, weighted_p, emb_p], axis=1)       # (Bp, K)
    act = jnp.pad(cat, ((0, 0), (0, Kp - K))).astype(jnp.bfloat16)    # (Bp, Kp)
    n_o = Op // to

    vmem_b = _vmem_bytes(
        ((Bp, Kp), jnp.bfloat16, 2),
        ((Kp, to), jnp.bfloat16, 2),
        ((1, to), jnp.float32, 2),
        ((Bp, to), jnp.float32, 2),
    )
    vmem_b = min(max(2 * vmem_b + (4 << 20), 16 << 20), 60 << 20)

    logits_p = pl.pallas_call(
        out_proj_kernel,
        out_shape=jax.ShapeDtypeStruct((Bp, Op), jnp.float32),
        grid_spec=pltpu.PrefetchScalarGridSpec(
            num_scalar_prefetch=0,
            grid=(n_o,),
            in_specs=[
                pl.BlockSpec((Bp, Kp), lambda j: (0, 0)),
                pl.BlockSpec((Kp, to), lambda j: (0, j)),
                pl.BlockSpec((1, to), lambda j: (0, j)),
            ],
            out_specs=pl.BlockSpec((Bp, to), lambda j: (0, j)),
        ),
        compiler_params=pltpu.CompilerParams(
            dimension_semantics=("parallel",),
            vmem_limit_bytes=vmem_b,
        ),
    )(act, kp["w_out_cat"], kp["bo"])

    return logits_p[:B, :O], h_new_p[:B, :H]


# ----------------------------------------------------------------------------
# Pure-JAX reference (mirrors the PyTorch forward) for correctness checking
# ----------------------------------------------------------------------------
def decoder_forward_ref(params, input_tokens, decoder_hidden, encoder_outputs):
    emb = params["embedding"][input_tokens]                      # (B, E)
    enc = jnp.transpose(encoder_outputs, (1, 0, 2))              # (B, S, D2)
    h = decoder_hidden
    H = h.shape[1]

    e_h = h @ params["wa_h"]
    e_e = jnp.einsum("bsd,da->bsa", enc, params["wa_e"])
    energy = jnp.tanh(e_h[:, None, :] + e_e + params["ba"][None, :, :])
    scores = jnp.sum(energy, axis=2)
    attn = jax.nn.softmax(scores, axis=1)
    weighted = jnp.einsum("bs,bsd->bd", attn, enc)

    x = jnp.concatenate([emb, weighted], axis=1)
    gi = x @ params["w_ih"] + params["b_ih"]
    gh = h @ params["w_hh"] + params["b_hh"]
    i_r, i_z, i_n = gi[:, :H], gi[:, H:2 * H], gi[:, 2 * H:]
    h_r, h_z, h_n = gh[:, :H], gh[:, H:2 * H], gh[:, 2 * H:]
    r = jax.nn.sigmoid(i_r + h_r)
    z = jax.nn.sigmoid(i_z + h_z)
    n = jnp.tanh(i_n + r * h_n)
    h_new = (1.0 - z) * n + z * h

    cat = jnp.concatenate([h_new, weighted, emb], axis=1)
    logits = cat @ params["w_out"] + params["b_out"]
    return logits, h_new


# ----------------------------------------------------------------------------
# Deterministic parameter construction (raw / unsplit layout)
# ----------------------------------------------------------------------------
def make_params(key, output_dim, emb_dim, enc_hid_dim, dec_hid_dim, attn_dim):
    d2 = 2 * enc_hid_dim
    keys = jax.random.split(key, 10)
    scale = 0.1

    def init(k, shape):
        return (scale * jax.random.normal(k, shape)).astype(jnp.float32)

    return {
        "embedding": init(keys[0], (output_dim, emb_dim)),
        # attention: Linear(dec_hid + 2*enc_hid -> attn_dim), split into the
        # decoder-hidden rows and the encoder-output rows of the concatenation.
        "wa_h": init(keys[1], (dec_hid_dim, attn_dim)),
        "wa_e": init(keys[2], (d2, attn_dim)),
        "ba": init(keys[3], (1, attn_dim)),
        # GRU(emb + 2*enc_hid -> dec_hid), gate order [r | z | n]
        "w_ih": init(keys[4], (emb_dim + d2, 3 * dec_hid_dim)),
        "w_hh": init(keys[5], (dec_hid_dim, 3 * dec_hid_dim)),
        "b_ih": init(keys[6], (1, 3 * dec_hid_dim)),
        "b_hh": init(keys[7], (1, 3 * dec_hid_dim)),
        # out: Linear(dec_hid + 2*enc_hid + emb -> output_dim)
        "w_out": init(keys[8], (dec_hid_dim + d2 + emb_dim, output_dim)),
        "b_out": init(keys[9], (1, output_dim)),
    }


if __name__ == "__main__":
    # Small shapes consistent with the module.
    output_dim = 32     # vocab size
    emb_dim = 8
    enc_hid_dim = 16    # encoder outputs have 2*16 = 32 features
    dec_hid_dim = 32
    attn_dim = 16
    batch = 2
    src_len = 13        # not a multiple of 8: exercises src padding + score mask

    key = jax.random.PRNGKey(0)
    kp_key, k1, k2, k3 = jax.random.split(key, 4)

    params = make_params(kp_key, output_dim, emb_dim, enc_hid_dim, dec_hid_dim, attn_dim)
    kparams = prepare_params(params, emb_dim, enc_hid_dim, dec_hid_dim, attn_dim, output_dim)

    input_tokens = jax.random.randint(k1, (batch,), 0, output_dim, dtype=jnp.int32)
    decoder_hidden = jax.random.normal(k2, (batch, dec_hid_dim), dtype=jnp.float32)
    encoder_outputs = jax.random.normal(
        k3, (src_len, batch, 2 * enc_hid_dim), dtype=jnp.float32
    )

    ref_logits, ref_hidden = decoder_forward_ref(
        params, input_tokens, decoder_hidden, encoder_outputs
    )

    # Tolerances account for the bf16 streaming casts (enc, attention/GRU/out
    # weights); all accumulation is f32.
    def check(logits, new_hidden):
        assert logits.shape == (batch, output_dim)
        assert new_hidden.shape == (batch, dec_hid_dim)
        assert jnp.allclose(logits, ref_logits, atol=3e-2, rtol=3e-2)
        assert jnp.allclose(new_hidden, ref_hidden, atol=3e-2, rtol=3e-2)

    # (a) forced small src tile: multi-tile online softmax + masked last tile.
    logits_a, hidden_a = decoder_forward(
        kparams, input_tokens, decoder_hidden, encoder_outputs, s_tile=8
    )
    jax.block_until_ready((logits_a, hidden_a))
    check(logits_a, hidden_a)

    # (b) auto (VMEM-budgeted) src tile: single padded tile + mask.
    logits_b, hidden_b = decoder_forward(
        kparams, input_tokens, decoder_hidden, encoder_outputs
    )
    jax.block_until_ready((logits_b, hidden_b))
    check(logits_b, hidden_b)

    print("KERNEL_OK")
</pallas_src>

<mosaic_0001>
module attributes {stable_mosaic.version = 11 : i64} {
  func.func @attn_gru_kernel(%arg0: i32, %arg1: memref<8x8xf32, #tpu.memory_space<vmem>>, %arg2: memref<8x128xf32, #tpu.memory_space<vmem>>, %arg3: memref<8x8x32xbf16, #tpu.memory_space<vmem>>, %arg4: memref<128x128xf32, #tpu.memory_space<vmem>>, %arg5: memref<32x128xbf16, #tpu.memory_space<vmem>>, %arg6: memref<1x128xf32, #tpu.memory_space<vmem>>, %arg7: memref<3x8x128xbf16, #tpu.memory_space<vmem>>, %arg8: memref<3x32x128xbf16, #tpu.memory_space<vmem>>, %arg9: memref<3x128x128xbf16, #tpu.memory_space<vmem>>, %arg10: memref<3x1x128xf32, #tpu.memory_space<vmem>>, %arg11: memref<3x1x128xf32, #tpu.memory_space<vmem>>, %arg12: memref<8x128xf32, #tpu.memory_space<vmem>>, %arg13: memref<8x32xf32, #tpu.memory_space<vmem>>, %arg14: memref<8x128xf32, #tpu.memory_space<vmem>>, %arg15: memref<1x8xf32, #tpu.memory_space<vmem>>, %arg16: memref<1x8xf32, #tpu.memory_space<vmem>>, %arg17: memref<8x32xf32, #tpu.memory_space<vmem>>) attributes {dimension_semantics = [#tpu.dimension_semantics<arbitrary>], iteration_bounds = array<i64: 2>, scalar_prefetch = 0 : i64, scratch_operands = 4 : i64, tpu.core_type = #tpu.core_type<tc>, window_params = [{pipeline_mode = #tpu.pipeline_mode<synchronous>, transform_indices = @transform_0, window_bounds = array<i64: 8, 8>}, {pipeline_mode = #tpu.pipeline_mode<synchronous>, transform_indices = @transform_1, window_bounds = array<i64: 8, 128>}, {transform_indices = @transform_2, window_bounds = array<i64: 8, 8, 32>}, {pipeline_mode = #tpu.pipeline_mode<synchronous>, transform_indices = @transform_3, window_bounds = array<i64: 128, 128>}, {pipeline_mode = #tpu.pipeline_mode<synchronous>, transform_indices = @transform_4, window_bounds = array<i64: 32, 128>}, {pipeline_mode = #tpu.pipeline_mode<synchronous>, transform_indices = @transform_5, window_bounds = array<i64: 1, 128>}, {pipeline_mode = #tpu.pipeline_mode<synchronous>, transform_indices = @transform_6, window_bounds = array<i64: 3, 8, 128>}, {pipeline_mode = #tpu.pipeline_mode<synchronous>, transform_indices = @transform_7, window_bounds = array<i64: 3, 32, 128>}, {pipeline_mode = #tpu.pipeline_mode<synchronous>, transform_indices = @transform_8, window_bounds = array<i64: 3, 128, 128>}, {pipeline_mode = #tpu.pipeline_mode<synchronous>, transform_indices = @transform_9, window_bounds = array<i64: 3, 1, 128>}, {pipeline_mode = #tpu.pipeline_mode<synchronous>, transform_indices = @transform_10, window_bounds = array<i64: 3, 1, 128>}, {pipeline_mode = #tpu.pipeline_mode<synchronous>, transform_indices = @transform_11, window_bounds = array<i64: 8, 128>}, {pipeline_mode = #tpu.pipeline_mode<synchronous>, transform_indices = @transform_12, window_bounds = array<i64: 8, 32>}]} {
    %c0_i32 = arith.constant 0 : i32
    %0 = arith.cmpi eq, %arg0, %c0_i32 : i32
    %1 = arith.extui %0 : i1 to i32
    %c0_i32_0 = arith.constant 0 : i32
    %2 = arith.cmpi ne, %1, %c0_i32_0 : i32
    scf.if %2 {
      %c0_27 = arith.constant 0 : index
      %c0_28 = arith.constant 0 : index
      %60 = vector.load %arg2[%c0_27, %c0_28] : memref<8x128xf32, #tpu.memory_space<vmem>>, vector<8x128xf32>
      %c0_29 = arith.constant 0 : index
      %c0_30 = arith.constant 0 : index
      %61 = vector.load %arg4[%c0_29, %c0_30] : memref<128x128xf32, #tpu.memory_space<vmem>>, vector<128x128xf32>
      %cst_31 = arith.constant dense<0.000000e+00> : vector<8x128xf32>
      %62 = tpu.matmul %60, %61, %cst_31 {dimension_numbers = #tpu.dot_dimension_numbers<[1], [0], [0], [1], [0, 0, 1, 1], [], []>} : vector<8x128xf32>, vector<128x128xf32>, vector<8x128xf32> -> vector<8x128xf32>
      %c0_32 = arith.constant 0 : index
      %c0_33 = arith.constant 0 : index
      %63 = vector.load %arg6[%c0_32, %c0_33] : memref<1x128xf32, #tpu.memory_space<vmem>>, vector<1x128xf32>
      %64 = vector.broadcast %63 : vector<1x128xf32> to vector<8x128xf32>
      %65 = arith.addf %62, %64 : vector<8x128xf32>
      %c0_34 = arith.constant 0 : index
      %c0_35 = arith.constant 0 : index
      %66 = vector.load %arg14[%c0_34, %c0_35] : memref<8x128xf32, #tpu.memory_space<vmem>>, vector<8x128xf32>
      tpu.vector_store %arg14[%c0_34, %c0_35], %65 {strides = array<i32>} : memref<8x128xf32, #tpu.memory_space<vmem>>, vector<8x128xf32>,
      %cst_36 = arith.constant -1.000000e+30 : f32
      %67 = vector.broadcast %cst_36 : f32 to vector<1x8xf32>
      %c0_37 = arith.constant 0 : index
      %c0_38 = arith.constant 0 : index
      %68 = vector.load %arg15[%c0_37, %c0_38] : memref<1x8xf32, #tpu.memory_space<vmem>>, vector<1x8xf32>
      tpu.vector_store %arg15[%c0_37, %c0_38], %67 {strides = array<i32>} : memref<1x8xf32, #tpu.memory_space<vmem>>, vector<1x8xf32>,
      %cst_39 = arith.constant 0.000000e+00 : f32
      %69 = vector.broadcast %cst_39 : f32 to vector<1x8xf32>
      %c0_40 = arith.constant 0 : index
      %c0_41 = arith.constant 0 : index
      %70 = vector.load %arg16[%c0_40, %c0_41] : memref<1x8xf32, #tpu.memory_space<vmem>>, vector<1x8xf32>
      tpu.vector_store %arg16[%c0_40, %c0_41], %69 {strides = array<i32>} : memref<1x8xf32, #tpu.memory_space<vmem>>, vector<1x8xf32>,
      %cst_42 = arith.constant 0.000000e+00 : f32
      %71 = vector.broadcast %cst_42 : f32 to vector<8x32xf32>
      %c0_43 = arith.constant 0 : index
      %c0_44 = arith.constant 0 : index
      %72 = vector.load %arg17[%c0_43, %c0_44] : memref<8x32xf32, #tpu.memory_space<vmem>>, vector<8x32xf32>
      tpu.vector_store %arg17[%c0_43, %c0_44], %71 {strides = array<i32>} : memref<8x32xf32, #tpu.memory_space<vmem>>, vector<8x32xf32>,
    } else {
    }
    %c0 = arith.constant 0 : index
    %c0_1 = arith.constant 0 : index
    %c0_2 = arith.constant 0 : index
    %3 = vector.load %arg3[%c0, %c0_1, %c0_2] : memref<8x8x32xbf16, #tpu.memory_space<vmem>>, vector<8x8x32xbf16>
    %4 = vector.shape_cast %3 : vector<8x8x32xbf16> to vector<64x32xbf16>
    %c0_3 = arith.constant 0 : index
    %c0_4 = arith.constant 0 : index
    %5 = vector.load %arg5[%c0_3, %c0_4] : memref<32x128xbf16, #tpu.memory_space<vmem>>, vector<32x128xbf16>
    %cst = arith.constant dense<0.000000e+00> : vector<64x128xf32>
    %6 = tpu.matmul %4, %5, %cst {dimension_numbers = #tpu.dot_dimension_numbers<[1], [0], [0], [1], [0, 0, 1, 1], [], []>} : vector<64x32xbf16>, vector<32x128xbf16>, vector<64x128xf32> -> vector<64x128xf32>
    %7 = vector.shape_cast %6 : vector<64x128xf32> to vector<8x8x128xf32>
    %c0_5 = arith.constant 0 : index
    %c0_6 = arith.constant 0 : index
    %8 = vector.load %arg14[%c0_5, %c0_6] : memref<8x128xf32, #tpu.memory_space<vmem>>, vector<8x128xf32>
    %9 = vector.shape_cast %8 : vector<8x128xf32> to vector<1x8x128xf32>
    %10 = vector.broadcast %9 : vector<1x8x128xf32> to vector<8x8x128xf32>
    %11 = arith.addf %10, %7 : vector<8x8x128xf32>
    %12 = math.tanh %11 : vector<8x8x128xf32>
    %cst_7 = arith.constant dense<0.000000e+00> : vector<8x8xf32>
    %13 = vector.multi_reduction <add>, %12, %cst_7 [2] : vector<8x8x128xf32> to vector<8x8xf32>
    %14 = tpu.iota {dimensions = array<i32: 0>} : vector<8x8xi32>
    %c8_i32 = arith.constant 8 : i32
    %15 = arith.muli %arg0, %c8_i32 : i32
    %16 = vector.broadcast %15 : i32 to vector<8x8xi32>
    %17 = arith.addi %14, %16 : vector<8x8xi32>
    %c13_i32 = arith.constant 13 : i32
    %18 = vector.broadcast %c13_i32 : i32 to vector<8x8xi32>
    %19 = arith.cmpi slt, %17, %18 : vector<8x8xi32>
    %cst_8 = arith.constant -1.000000e+30 : f32
    %20 = vector.broadcast %cst_8 : f32 to vector<8x8xf32>
    %21 = arith.select %19, %13, %20 : vector<8x8xi1>, vector<8x8xf32>
    %c0_9 = arith.constant 0 : index
    %c0_10 = arith.constant 0 : index
    %22 = vector.load %arg15[%c0_9, %c0_10] : memref<1x8xf32, #tpu.memory_space<vmem>>, vector<1x8xf32>
    %cst_11 = arith.constant dense<0xFF800000> : vector<8xf32>
    %23 = vector.multi_reduction <maximumf>, %21, %cst_11 [0] : vector<8x8xf32> to vector<8xf32>
    %24 = vector.shape_cast %23 : vector<8xf32> to vector<1x8xf32>
    %25 = arith.maximumf %22, %24 : vector<1x8xf32>
    %26 = arith.subf %22, %25 : vector<1x8xf32>
    %27 = math.exp %26 : vector<1x8xf32>
    %28 = vector.broadcast %25 : vector<1x8xf32> to vector<8x8xf32>
    %29 = arith.subf %21, %28 : vector<8x8xf32>
    %30 = math.exp %29 : vector<8x8xf32>
    %c0_12 = arith.constant 0 : index
    %c0_13 = arith.constant 0 : index
    %31 = vector.load %arg16[%c0_12, %c0_13] : memref<1x8xf32, #tpu.memory_space<vmem>>, vector<1x8xf32>
    %32 = arith.mulf %27, %31 : vector<1x8xf32>
    %cst_14 = arith.constant dense<0.000000e+00> : vector<8xf32>
    %33 = vector.multi_reduction <add>, %30, %cst_14 [0] : vector<8x8xf32> to vector<8xf32>
    %34 = vector.shape_cast %33 : vector<8xf32> to vector<1x8xf32>
    %35 = arith.addf %32, %34 : vector<1x8xf32>
    %c0_15 = arith.constant 0 : index
    %c0_16 = arith.constant 0 : index
    %36 = vector.load %arg16[%c0_15, %c0_16] : memref<1x8xf32, #tpu.memory_space<vmem>>, vector<1x8xf32>
    tpu.vector_store %arg16[%c0_15, %c0_16], %35 {strides = array<i32>} : memref<1x8xf32, #tpu.memory_space<vmem>>, vector<1x8xf32>,
    %c0_17 = arith.constant 0 : index
    %c0_18 = arith.constant 0 : index
    %37 = vector.load %arg17[%c0_17, %c0_18] : memref<8x32xf32, #tpu.memory_space<vmem>>, vector<8x32xf32>
    %38 = tpu.iota {dimensions = array<i32: 0>} : vector<8x8xi32>
    %39 = tpu.iota {dimensions = array<i32: 1>} : vector<8x8xi32>
    %40 = arith.cmpi eq, %38, %39 : vector<8x8xi32>
    %cst_19 = arith.constant 0.000000e+00 : f32
    %41 = vector.shape_cast %27 : vector<1x8xf32> to vector<1x8xf32>
    %42 = vector.broadcast %41 : vector<1x8xf32> to vector<8x8xf32>
    %43 = vector.broadcast %cst_19 : f32 to vector<8x8xf32>
    %44 = arith.select %40, %42, %43 : vector<8x8xi1>, vector<8x8xf32>
    %cst_20 = arith.constant dense<0.000000e+00> : vector<8xf32>
    %45 = vector.multi_reduction <add>, %44, %cst_20 [1] : vector<8x8xf32> to vector<8xf32>
    %46 = vector.shape_cast %45 : vector<8xf32> to vector<8x1xf32>
    %47 = vector.broadcast %46 : vector<8x1xf32> to vector<8x32xf32>
    %48 = arith.mulf %37, %47 : vector<8x32xf32>
    %49 = vector.shape_cast %30 : vector<8x8xf32> to vector<8x8x1xf32>
    %50 = arith.extf %3 : vector<8x8x32xbf16> to vector<8x8x32xf32>
    %51 = vector.broadcast %49 : vector<8x8x1xf32> to vector<8x8x32xf32>
    %52 = arith.mulf %51, %50 : vector<8x8x32xf32>
    %cst_21 = arith.constant dense<0.000000e+00> : vector<8x32xf32>
    %53 = vector.multi_reduction <add>, %52, %cst_21 [0] : vector<8x8x32xf32> to vector<8x32xf32>
    %54 = arith.addf %48, %53 : vector<8x32xf32>
    %c0_22 = arith.constant 0 : index
    %c0_23 = arith.constant 0 : index
    %55 = vector.load %arg17[%c0_22, %c0_23] : memref<8x32xf32, #tpu.memory_space<vmem>>, vector<8x32xf32>
    tpu.vector_store %arg17[%c0_22, %c0_23], %54 {strides = array<i32>} : memref<8x32xf32, #tpu.memory_space<vmem>>, vector<8x32xf32>,
    %c0_24 = arith.constant 0 : index
    %c0_25 = arith.constant 0 : index
    %56 = vector.load %arg15[%c0_24, %c0_25] : memref<1x8xf32, #tpu.memory_space<vmem>>, vector<1x8xf32>
    tpu.vector_store %arg15[%c0_24, %c0_25], %25 {strides = array<i32>} : memref<1x8xf32, #tpu.memory_space<vmem>>, vector<1x8xf32>,
    %c1_i32 = arith.constant 1 : i32
    %57 = arith.cmpi eq, %arg0, %c1_i32 : i32
    %58 = arith.extui %57 : i1 to i32
    %c0_i32_26 = arith.constant 0 : i32
    %59 = arith.cmpi ne, %58, %c0_i32_26 : i32
    scf.if %59 {
      %c0_27 = arith.constant 0 : index
      %c0_28 = arith.constant 0 : index
      %60 = vector.load %arg16[%c0_27, %c0_28] : memref<1x8xf32, #tpu.memory_space<vmem>>, vector<1x8xf32>
      %61 = tpu.iota {dimensions = array<i32: 0>} : vector<8x8xi32>
      %62 = tpu.iota {dimensions = array<i32: 1>} : vector<8x8xi32>
      %63 = arith.cmpi eq, %61, %62 : vector<8x8xi32>
      %cst_29 = arith.constant 0.000000e+00 : f32
      %64 = vector.shape_cast %60 : vector<1x8xf32> to vector<1x8xf32>
      %65 = vector.broadcast %64 : vector<1x8xf32> to vector<8x8xf32>
      %66 = vector.broadcast %cst_29 : f32 to vector<8x8xf32>
      %67 = arith.select %63, %65, %66 : vector<8x8xi1>, vector<8x8xf32>
      %cst_30 = arith.constant dense<0.000000e+00> : vector<8xf32>
      %68 = vector.multi_reduction <add>, %67, %cst_30 [1] : vector<8x8xf32> to vector<8xf32>
      %69 = vector.shape_cast %68 : vector<8xf32> to vector<8x1xf32>
      %c0_31 = arith.constant 0 : index
      %c0_32 = arith.constant 0 : index
      %70 = vector.load %arg17[%c0_31, %c0_32] : memref<8x32xf32, #tpu.memory_space<vmem>>, vector<8x32xf32>
      %71 = vector.broadcast %69 : vector<8x1xf32> to vector<8x32xf32>
      %72 = arith.divf %70, %71 : vector<8x32xf32>
      %c0_33 = arith.constant 0 : index
      %c0_34 = arith.constant 0 : index
      %73 = vector.load %arg1[%c0_33, %c0_34] : memref<8x8xf32, #tpu.memory_space<vmem>>, vector<8x8xf32>
      %74 = arith.truncf %73 : vector<8x8xf32> to vector<8x8xbf16>
      %c0_35 = arith.constant 0 : index
      %c0_36 = arith.constant 0 : index
      %75 = vector.load %arg2[%c0_35, %c0_36] : memref<8x128xf32, #tpu.memory_space<vmem>>, vector<8x128xf32>
      %76 = arith.truncf %75 : vector<8x128xf32> to vector<8x128xbf16>
      %77 = arith.truncf %72 : vector<8x32xf32> to vector<8x32xbf16>
      %c0_37 = arith.constant 0 : index
      %c0_38 = arith.constant 0 : index
      %c0_39 = arith.constant 0 : index
      %78 = vector.load %arg7[%c0_37, %c0_38, %c0_39] : memref<3x8x128xbf16, #tpu.memory_space<vmem>>, vector<1x8x128xbf16>
      %79 = vector.shape_cast %78 : vector<1x8x128xbf16> to vector<8x128xbf16>
      %cst_40 = arith.constant dense<0.000000e+00> : vector<8x128xf32>
      %80 = tpu.matmul %74, %79, %cst_40 {dimension_numbers = #tpu.dot_dimension_numbers<[1], [0], [0], [1], [0, 0, 1, 1], [], []>} : vector<8x8xbf16>, vector<8x128xbf16>, vector<8x128xf32> -> vector<8x128xf32>
      %c0_41 = arith.constant 0 : index
      %c0_42 = arith.constant 0 : index
      %c0_43 = arith.constant 0 : index
      %81 = vector.load %arg8[%c0_41, %c0_42, %c0_43] : memref<3x32x128xbf16, #tpu.memory_space<vmem>>, vector<1x32x128xbf16>
      %82 = vector.shape_cast %81 : vector<1x32x128xbf16> to vector<32x128xbf16>
      %cst_44 = arith.constant dense<0.000000e+00> : vector<8x128xf32>
      %83 = tpu.matmul %77, %82, %cst_44 {dimension_numbers = #tpu.dot_dimension_numbers<[1], [0], [0], [1], [0, 0, 1, 1], [], []>} : vector<8x32xbf16>, vector<32x128xbf16>, vector<8x128xf32> -> vector<8x128xf32>
      %84 = arith.addf %80, %83 : vector<8x128xf32>
      %c0_45 = arith.constant 0 : index
      %c0_46 = arith.constant 0 : index
      %c0_47 = arith.constant 0 : index
      %85 = vector.load %arg10[%c0_45, %c0_46, %c0_47] : memref<3x1x128xf32, #tpu.memory_space<vmem>>, vector<1x1x128xf32>
      %86 = vector.shape_cast %85 : vector<1x1x128xf32> to vector<1x128xf32>
      %87 = vector.broadcast %86 : vector<1x128xf32> to vector<8x128xf32>
      %88 = arith.addf %84, %87 : vector<8x128xf32>
      %c0_48 = arith.constant 0 : index
      %c0_49 = arith.constant 0 : index
      %c0_50 = arith.constant 0 : index
      %89 = vector.load %arg9[%c0_48, %c0_49, %c0_50] : memref<3x128x128xbf16, #tpu.memory_space<vmem>>, vector<1x128x128xbf16>
      %90 = vector.shape_cast %89 : vector<1x128x128xbf16> to vector<128x128xbf16>
      %cst_51 = arith.constant dense<0.000000e+00> : vector<8x128xf32>
      %91 = tpu.matmul %76, %90, %cst_51 {dimension_numbers = #tpu.dot_dimension_numbers<[1], [0], [0], [1], [0, 0, 1, 1], [], []>} : vector<8x128xbf16>, vector<128x128xbf16>, vector<8x128xf32> -> vector<8x128xf32>
      %c0_52 = arith.constant 0 : index
      %c0_53 = arith.constant 0 : index
      %c0_54 = arith.constant 0 : index
      %92 = vector.load %arg11[%c0_52, %c0_53, %c0_54] : memref<3x1x128xf32, #tpu.memory_space<vmem>>, vector<1x1x128xf32>
      %93 = vector.shape_cast %92 : vector<1x1x128xf32> to vector<1x128xf32>
      %94 = vector.broadcast %93 : vector<1x128xf32> to vector<8x128xf32>
      %95 = arith.addf %91, %94 : vector<8x128xf32>
      %96 = arith.addf %88, %95 : vector<8x128xf32>
      %97 = arith.negf %96 : vector<8x128xf32>
      %98 = math.exp %97 : vector<8x128xf32>
      %cst_55 = arith.constant 1.000000e+00 : f32
      %99 = vector.broadcast %cst_55 : f32 to vector<8x128xf32>
      %100 = arith.addf %99, %98 : vector<8x128xf32>
      %101 = arith.divf %99, %100 : vector<8x128xf32>
      %c1 = arith.constant 1 : index
      %c0_56 = arith.constant 0 : index
      %c0_57 = arith.constant 0 : index
      %102 = vector.load %arg7[%c1, %c0_56, %c0_57] : memref<3x8x128xbf16, #tpu.memory_space<vmem>>, vector<1x8x128xbf16>
      %103 = vector.shape_cast %102 : vector<1x8x128xbf16> to vector<8x128xbf16>
      %cst_58 = arith.constant dense<0.000000e+00> : vector<8x128xf32>
      %104 = tpu.matmul %74, %103, %cst_58 {dimension_numbers = #tpu.dot_dimension_numbers<[1], [0], [0], [1], [0, 0, 1, 1], [], []>} : vector<8x8xbf16>, vector<8x128xbf16>, vector<8x128xf32> -> vector<8x128xf32>
      %c1_59 = arith.constant 1 : index
      %c0_60 = arith.constant 0 : index
      %c0_61 = arith.constant 0 : index
      %105 = vector.load %arg8[%c1_59, %c0_60, %c0_61] : memref<3x32x128xbf16, #tpu.memory_space<vmem>>, vector<1x32x128xbf16>
      %106 = vector.shape_cast %105 : vector<1x32x128xbf16> to vector<32x128xbf16>
      %cst_62 = arith.constant dense<0.000000e+00> : vector<8x128xf32>
      %107 = tpu.matmul %77, %106, %cst_62 {dimension_numbers = #tpu.dot_dimension_numbers<[1], [0], [0], [1], [0, 0, 1, 1], [], []>} : vector<8x32xbf16>, vector<32x128xbf16>, vector<8x128xf32> -> vector<8x128xf32>
      %108 = arith.addf %104, %107 : vector<8x128xf32>
      %c1_63 = arith.constant 1 : index
      %c0_64 = arith.constant 0 : index
      %c0_65 = arith.constant 0 : index
      %109 = vector.load %arg10[%c1_63, %c0_64, %c0_65] : memref<3x1x128xf32, #tpu.memory_space<vmem>>, vector<1x1x128xf32>
      %110 = vector.shape_cast %109 : vector<1x1x128xf32> to vector<1x128xf32>
      %111 = vector.broadcast %110 : vector<1x128xf32> to vector<8x128xf32>
      %112 = arith.addf %108, %111 : vector<8x128xf32>
      %c1_66 = arith.constant 1 : index
      %c0_67 = arith.constant 0 : index
      %c0_68 = arith.constant 0 : index
      %113 = vector.load %arg9[%c1_66, %c0_67, %c0_68] : memref<3x128x128xbf16, #tpu.memory_space<vmem>>, vector<1x128x128xbf16>
      %114 = vector.shape_cast %113 : vector<1x128x128xbf16> to vector<128x128xbf16>
      %cst_69 = arith.constant dense<0.000000e+00> : vector<8x128xf32>
      %115 = tpu.matmul %76, %114, %cst_69 {dimension_numbers = #tpu.dot_dimension_numbers<[1], [0], [0], [1], [0, 0, 1, 1], [], []>} : vector<8x128xbf16>, vector<128x128xbf16>, vector<8x128xf32> -> vector<8x128xf32>
      %c1_70 = arith.constant 1 : index
      %c0_71 = arith.constant 0 : index
      %c0_72 = arith.constant 0 : index
      %116 = vector.load %arg11[%c1_70, %c0_71, %c0_72] : memref<3x1x128xf32, #tpu.memory_space<vmem>>, vector<1x1x128xf32>
      %117 = vector.shape_cast %116 : vector<1x1x128xf32> to vector<1x128xf32>
      %118 = vector.broadcast %117 : vector<1x128xf32> to vector<8x128xf32>
      %119 = arith.addf %115, %118 : vector<8x128xf32>
      %120 = arith.addf %112, %119 : vector<8x128xf32>
      %121 = arith.negf %120 : vector<8x128xf32>
      %122 = math.exp %121 : vector<8x128xf32>
      %cst_73 = arith.constant 1.000000e+00 : f32
      %123 = vector.broadcast %cst_73 : f32 to vector<8x128xf32>
      %124 = arith.addf %123, %122 : vector<8x128xf32>
      %125 = arith.divf %123, %124 : vector<8x128xf32>
      %c2 = arith.constant 2 : index
      %c0_74 = arith.constant 0 : index
      %c0_75 = arith.constant 0 : index
      %126 = vector.load %arg7[%c2, %c0_74, %c0_75] : memref<3x8x128xbf16, #tpu.memory_space<vmem>>, vector<1x8x128xbf16>
      %127 = vector.shape_cast %126 : vector<1x8x128xbf16> to vector<8x128xbf16>
      %cst_76 = arith.constant dense<0.000000e+00> : vector<8x128xf32>
      %128 = tpu.matmul %74, %127, %cst_76 {dimension_numbers = #tpu.dot_dimension_numbers<[1], [0], [0], [1], [0, 0, 1, 1], [], []>} : vector<8x8xbf16>, vector<8x128xbf16>, vector<8x128xf32> -> vector<8x128xf32>
      %c2_77 = arith.constant 2 : index
      %c0_78 = arith.constant 0 : index
      %c0_79 = arith.constant 0 : index
      %129 = vector.load %arg8[%c2_77, %c0_78, %c0_79] : memref<3x32x128xbf16, #tpu.memory_space<vmem>>, vector<1x32x128xbf16>
      %130 = vector.shape_cast %129 : vector<1x32x128xbf16> to vector<32x128xbf16>
      %cst_80 = arith.constant dense<0.000000e+00> : vector<8x128xf32>
      %131 = tpu.matmul %77, %130, %cst_80 {dimension_numbers = #tpu.dot_dimension_numbers<[1], [0], [0], [1], [0, 0, 1, 1], [], []>} : vector<8x32xbf16>, vector<32x128xbf16>, vector<8x128xf32> -> vector<8x128xf32>
      %132 = arith.addf %128, %131 : vector<8x128xf32>
      %c2_81 = arith.constant 2 : index
      %c0_82 = arith.constant 0 : index
      %c0_83 = arith.constant 0 : index
      %133 = vector.load %arg10[%c2_81, %c0_82, %c0_83] : memref<3x1x128xf32, #tpu.memory_space<vmem>>, vector<1x1x128xf32>
      %134 = vector.shape_cast %133 : vector<1x1x128xf32> to vector<1x128xf32>
      %135 = vector.broadcast %134 : vector<1x128xf32> to vector<8x128xf32>
      %136 = arith.addf %132, %135 : vector<8x128xf32>
      %c2_84 = arith.constant 2 : index
      %c0_85 = arith.constant 0 : index
      %c0_86 = arith.constant 0 : index
      %137 = vector.load %arg9[%c2_84, %c0_85, %c0_86] : memref<3x128x128xbf16, #tpu.memory_space<vmem>>, vector<1x128x128xbf16>
      %138 = vector.shape_cast %137 : vector<1x128x128xbf16> to vector<128x128xbf16>
      %cst_87 = arith.constant dense<0.000000e+00> : vector<8x128xf32>
      %139 = tpu.matmul %76, %138, %cst_87 {dimension_numbers = #tpu.dot_dimension_numbers<[1], [0], [0], [1], [0, 0, 1, 1], [], []>} : vector<8x128xbf16>, vector<128x128xbf16>, vector<8x128xf32> -> vector<8x128xf32>
      %c2_88 = arith.constant 2 : index
      %c0_89 = arith.constant 0 : index
      %c0_90 = arith.constant 0 : index
      %140 = vector.load %arg11[%c2_88, %c0_89, %c0_90] : memref<3x1x128xf32, #tpu.memory_space<vmem>>, vector<1x1x128xf32>
      %141 = vector.shape_cast %140 : vector<1x1x128xf32> to vector<1x128xf32>
      %142 = vector.broadcast %141 : vector<1x128xf32> to vector<8x128xf32>
      %143 = arith.addf %139, %142 : vector<8x128xf32>
      %144 = arith.mulf %101, %143 : vector<8x128xf32>
      %145 = arith.addf %136, %144 : vector<8x128xf32>
      %146 = math.tanh %145 : vector<8x128xf32>
      %cst_91 = arith.constant 1.000000e+00 : f32
      %147 = vector.broadcast %cst_91 : f32 to vector<8x128xf32>
      %148 = arith.subf %147, %125 : vector<8x128xf32>
      %149 = arith.mulf %148, %146 : vector<8x128xf32>
      %150 = arith.mulf %125, %75 : vector<8x128xf32>
      %151 = arith.addf %149, %150 : vector<8x128xf32>
      %c0_92 = arith.constant 0 : index
      %c0_93 = arith.constant 0 : index
      %152 = vector.load %arg12[%c0_92, %c0_93] : memref<8x128xf32, #tpu.memory_space<vmem>>, vector<8x128xf32>
      tpu.vector_store %arg12[%c0_92, %c0_93], %151 {strides = array<i32>} : memref<8x128xf32, #tpu.memory_space<vmem>>, vector<8x128xf32>,
      %c0_94 = arith.constant 0 : index
      %c0_95 = arith.constant 0 : index
      %153 = vector.load %arg13[%c0_94, %c0_95] : memref<8x32xf32, #tpu.memory_space<vmem>>, vector<8x32xf32>
      tpu.vector_store %arg13[%c0_94, %c0_95], %72 {strides = array<i32>} : memref<8x32xf32, #tpu.memory_space<vmem>>, vector<8x32xf32>,
    } else {
    }
    return
  }
  func.func @transform_0(%arg0: i32) -> (i32, i32) {
    %c0_i32 = arith.constant 0 : i32
    %c0_i32_0 = arith.constant 0 : i32
    %c0_i32_1 = arith.constant 0 : i32
    return %c0_i32, %c0_i32_0 : i32, i32
  }
  func.func @transform_1(%arg0: i32) -> (i32, i32) {
    %c0_i32 = arith.constant 0 : i32
    %c0_i32_0 = arith.constant 0 : i32
    %c0_i32_1 = arith.constant 0 : i32
    return %c0_i32, %c0_i32_0 : i32, i32
  }
  func.func @transform_2(%arg0: i32) -> (i32, i32, i32) {
    %c0_i32 = arith.constant 0 : i32
    %c0_i32_0 = arith.constant 0 : i32
    %c0_i32_1 = arith.constant 0 : i32
    return %arg0, %c0_i32, %c0_i32_0 : i32, i32, i32
  }
  func.func @transform_3(%arg0: i32) -> (i32, i32) {
    %c0_i32 = arith.constant 0 : i32
    %c0_i32_0 = arith.constant 0 : i32
    %c0_i32_1 = arith.constant 0 : i32
    return %c0_i32, %c0_i32_0 : i32, i32
  }
  func.func @transform_4(%arg0: i32) -> (i32, i32) {
    %c0_i32 = arith.constant 0 : i32
    %c0_i32_0 = arith.constant 0 : i32
    %c0_i32_1 = arith.constant 0 : i32
    return %c0_i32, %c0_i32_0 : i32, i32
  }
  func.func @transform_5(%arg0: i32) -> (i32, i32) {
    %c0_i32 = arith.constant 0 : i32
    %c0_i32_0 = arith.constant 0 : i32
    %c0_i32_1 = arith.constant 0 : i32
    return %c0_i32, %c0_i32_0 : i32, i32
  }
  func.func @transform_6(%arg0: i32) -> (i32, i32, i32) {
    %c0_i32 = arith.constant 0 : i32
    %c0_i32_0 = arith.constant 0 : i32
    %c0_i32_1 = arith.constant 0 : i32
    %c0_i32_2 = arith.constant 0 : i32
    return %c0_i32, %c0_i32_0, %c0_i32_1 : i32, i32, i32
  }
  func.func @transform_7(%arg0: i32) -> (i32, i32, i32) {
    %c0_i32 = arith.constant 0 : i32
    %c0_i32_0 = arith.constant 0 : i32
    %c0_i32_1 = arith.constant 0 : i32
    %c0_i32_2 = arith.constant 0 : i32
    return %c0_i32, %c0_i32_0, %c0_i32_1 : i32, i32, i32
  }
  func.func @transform_8(%arg0: i32) -> (i32, i32, i32) {
    %c0_i32 = arith.constant 0 : i32
    %c0_i32_0 = arith.constant 0 : i32
    %c0_i32_1 = arith.constant 0 : i32
    %c0_i32_2 = arith.constant 0 : i32
    return %c0_i32, %c0_i32_0, %c0_i32_1 : i32, i32, i32
  }
  func.func @transform_9(%arg0: i32) -> (i32, i32, i32) {
    %c0_i32 = arith.constant 0 : i32
    %c0_i32_0 = arith.constant 0 : i32
    %c0_i32_1 = arith.constant 0 : i32
    %c0_i32_2 = arith.constant 0 : i32
    return %c0_i32, %c0_i32_0, %c0_i32_1 : i32, i32, i32
  }
  func.func @transform_10(%arg0: i32) -> (i32, i32, i32) {
    %c0_i32 = arith.constant 0 : i32
    %c0_i32_0 = arith.constant 0 : i32
    %c0_i32_1 = arith.constant 0 : i32
    %c0_i32_2 = arith.constant 0 : i32
    return %c0_i32, %c0_i32_0, %c0_i32_1 : i32, i32, i32
  }
  func.func @transform_11(%arg0: i32) -> (i32, i32) {
    %c0_i32 = arith.constant 0 : i32
    %c0_i32_0 = arith.constant 0 : i32
    %c0_i32_1 = arith.constant 0 : i32
    return %c0_i32, %c0_i32_0 : i32, i32
  }
  func.func @transform_12(%arg0: i32) -> (i32, i32) {
    %c0_i32 = arith.constant 0 : i32
    %c0_i32_0 = arith.constant 0 : i32
    %c0_i32_1 = arith.constant 0 : i32
    return %c0_i32, %c0_i32_0 : i32, i32
  }
}

</mosaic_0001>

<llo_original>
// kernel: tpu_custom_call.1
$region0: #{tpu_custom_call.1}
  #allocation0 [shape = 'u32[]', space=smem, size = 0x4, offset = 0x4, fixed_abs, tag = 'smem constant byte address 0x4 - core index']
  #allocation1 [shape = 'u32[144,128]{1,0:T(1,128)}', space=vmem, size = 0x12000, scoped, tag = 'internal scratch']
  #allocation2 [shape = 'f32[8,128]{1,0:T(8,128)}', space=vmem, size = 0x1000, scoped, tag = 'scratch operand']
  #allocation3 [shape = 'f32[1,8]{1,0:T(1,128)}', space=vmem, size = 0x200, scoped, tag = 'scratch operand']
  #allocation4 [shape = 'f32[1,8]{1,0:T(1,128)}', space=vmem, size = 0x200, scoped, tag = 'scratch operand']
  #allocation5 [shape = 'f32[8,32]{1,0:T(8,128)}', space=vmem, size = 0x1000, scoped, tag = 'scratch operand']
  %s0 = inlined_call_operand.hbm [shape: f32[8,8], index: 0, kind: input, shape index: {}]
  %s1 = inlined_call_operand.hbm [shape: f32[8,128], index: 1, kind: input, shape index: {}]
  %s2 = inlined_call_operand.hbm [shape: bf16[16,8,32], index: 2, kind: input, shape index: {}]
  %s3 = inlined_call_operand.hbm [shape: f32[128,128], index: 3, kind: input, shape index: {}]
  %s4 = inlined_call_operand.hbm [shape: bf16[32,128], index: 4, kind: input, shape index: {}]
  %s5 = inlined_call_operand.vmem [shape: f32[1,128], index: 5, kind: input, shape index: {}]
  %s6 = inlined_call_operand.vmem [shape: bf16[3,8,128], index: 6, kind: input, shape index: {}]
  %s7 = inlined_call_operand.hbm [shape: bf16[3,32,128], index: 7, kind: input, shape index: {}]
  %s8 = inlined_call_operand.hbm [shape: bf16[3,128,128], index: 8, kind: input, shape index: {}]
  %s9 = inlined_call_operand.vmem [shape: f32[3,1,128], index: 9, kind: input, shape index: {}]
  %s10 = inlined_call_operand.vmem [shape: f32[3,1,128], index: 10, kind: input, shape index: {}]
  %s11 = inlined_call_operand.hbm [shape: f32[8,128], index: 11, kind: output, shape index: {0}]
  %s12 = inlined_call_operand.hbm [shape: f32[8,32], index: 12, kind: output, shape index: {1}]
  %13 = xla_tuple %s11, %s12
  %s14 = sld [smem:[#allocation0]]
  $region121: #{tpu_custom_call.1} parent=0
    _
  %s16 = ssub.s32 1, %s14
  %s17 = scalar_select 0, %s16, %s14
  $region1: #{tpu_custom_call.1} parent=0
    #allocation6 [shape = 'u8[4096]{0}', space=vmem, size = 0x1000, scoped, tag = 'input window, operand 0, single buffered']
    #allocation7 [shape = 's32[2]{0}', space=sflag, size = 0x8, scoped, tag = 'scoped memory for tpu_custom_call.1']
    #allocation8 [shape = 's32[2]{0}', space=sflag, size = 0x8, scoped, tag = 'scoped memory for tpu_custom_call.1']
    #allocation9 [shape = 'u8[4096]{0}', space=vmem, size = 0x1000, scoped, tag = 'input window, operand 1, single buffered']
    #allocation10 [shape = 's32[1]{0}', space=sflag, size = 0x4, scoped, tag = 'scoped memory for tpu_custom_call.1']
    #allocation11 [shape = 'u8[32768]{0}', space=vmem, size = 0x8000, scoped, tag = 'input window, operand 2']
    #allocation12 [shape = 'u8[65536]{0}', space=vmem, size = 0x10000, scoped, tag = 'input window, operand 3, single buffered']
    #allocation13 [shape = 'u8[8192]{0}', space=vmem, size = 0x2000, scoped, tag = 'input window, operand 4, single buffered']
    #allocation14 [shape = 's32[1]{0}', space=sflag, size = 0x4, scoped, tag = 'scoped memory for tpu_custom_call.1']
    #allocation15 [shape = 'u8[24576]{0}', space=vmem, size = 0x6000, scoped, tag = 'input window, operand 7, single buffered']
    #allocation16 [shape = 'u8[98304]{0}', space=vmem, size = 0x18000, scoped, tag = 'input window, operand 8, single buffered']
    #allocation17 [shape = 's32[1]{0}', space=sflag, size = 0x4, scoped, tag = 'scoped memory for tpu_custom_call.1']
    #allocation18 [shape = 'u8[4096]{0}', space=vmem, size = 0x1000, scoped, tag = 'output window, operand 0, single buffered']
    #allocation19 [shape = 'u8[4096]{0}', space=vmem, size = 0x1000, scoped, tag = 'output window, operand 1, single buffered']
    #allocation20 [shape = 's32[1]{0}', space=sflag, size = 0x4, scoped, tag = 'scoped memory for tpu_custom_call.1']
    %18 = vsyncpa [#allocation7], 0
    %19 = vsyncpa [#allocation10], 0
    %20 = vsyncpa [#allocation14], 0
    %21 = vsyncpa [#allocation17], 0
    %22 = vsyncpa [#allocation8], 0
    %23 = vsyncpa [#allocation20], 0
    loop: start=0, step=1, limit=4
    $region2: #{tpu_custom_call.1} parent=1 // loop_pre_header
      _
    $region3: #{tpu_custom_call.1} parent=1 // loop_header
      %s25 = sphi 0, %s29
      %p26 = scmp.ge.s32.totalorder %s25, 4
      %s33 = sphi 0, %s33
      %s35 = sphi 0, %s33
      %s36 = sphi 0, %s35
      %s50 = sphi 0, %s36
      %s54 = sphi 0, %s54
      %s56 = sphi 0, %s54
      %s57 = sphi 0, %s56
      %s71 = sphi 0, %s57
      %s77 = sphi 0, %s79
      %s80 = sphi 0, %s77
      %s81 = sphi 0, %s80
      %s97 = sphi 0, %s81
      %s101 = sphi 0, %s101
      %s103 = sphi 0, %s101
      %s104 = sphi 0, %s103
      %s118 = sphi 0, %s104
      %s122 = sphi 0, %s122
      %s124 = sphi 0, %s122
      %s125 = sphi 0, %s124
      %s139 = sphi 0, %s125
      %s143 = sphi 0, %s143
      %s145 = sphi 0, %s143
      %s146 = sphi 0, %s145
      %s160 = sphi 0, %s146
      %s164 = sphi 0, %s164
      %s166 = sphi 0, %s164
      %s167 = sphi 0, %s166
      %s181 = sphi 0, %s167
      %s185 = sphi 0, %s185
      %s187 = sphi 0, %s185
      %s188 = sphi 0, %s187
      %s202 = sphi 0, %s188
      %s206 = sphi 0, %s206
      %s208 = sphi 0, %s206
      %s209 = sphi 0, %s208
      %s223 = sphi 0, %s209
      %s227 = sphi 0, %s227
      %s229 = sphi 0, %s227
      %s230 = sphi 0, %s229
      %s244 = sphi 0, %s230
      %s248 = sphi 0, %s248
      %s250 = sphi 0, %s248
      %s251 = sphi 0, %s250
      %s265 = sphi 0, %s251
      %s269 = sphi 0, %s269
      %s271 = sphi 0, %s269
      %s272 = sphi 0, %s271
      %s286 = sphi 0, %s272
      %s290 = sphi 0, %s290
      %s292 = sphi 0, %s290
      %s293 = sphi 0, %s292
      %s307 = sphi 0, %s293
    $region4: #{tpu_custom_call.1} parent=1 // loop_header_branch
      %28 = sbr.rel (%p26) target = $region8
    $region5: #{tpu_custom_call.1} parent=1 // loop_body
      %s30 = ssub.s32 %s25, 1
      %s31 = ssub.s32 %s25, 2
      %s32 = sadd.s32 %s25, 1
      %s34 = sadd.s32 %s33, 1
      %p37 = scmp.eq.s32.totalorder %s25, 1
      %p38 = scmp.ne.s32.totalorder %s33, %s35
      %p39 = scmp.eq.s32.totalorder %s25, 0
      %p40 = por %p38, %p39
      %p41 = scmp.ne.s32.totalorder %s33, %s35
      %p42 = scmp.eq.s32.totalorder %s30, 1
      %p43 = por %p41, %p42
      %p44 = scmp.ne.s32.totalorder %s35, %s36
      %p45 = scmp.eq.s32.totalorder %s30, 0
      %p46 = por %p44, %p45
      %p47 = scmp.ne.s32.totalorder %s35, %s36
      %p48 = scmp.eq.s32.totalorder %s31, 1
      %p49 = por %p47, %p48
      %p51 = scmp.ne.s32.totalorder %s36, %s50
      %p52 = scmp.eq.s32.totalorder %s31, 0
      %p53 = por %p51, %p52
      %s55 = sadd.s32 %s54, 1
      %p58 = scmp.eq.s32.totalorder %s25, 1
      %p59 = scmp.ne.s32.totalorder %s54, %s56
      %p60 = scmp.eq.s32.totalorder %s25, 0
      %p61 = por %p59, %p60
      %p62 = scmp.ne.s32.totalorder %s54, %s56
      %p63 = scmp.eq.s32.totalorder %s30, 1
      %p64 = por %p62, %p63
      %p65 = scmp.ne.s32.totalorder %s56, %s57
      %p66 = scmp.eq.s32.totalorder %s30, 0
      %p67 = por %p65, %p66
      %p68 = scmp.ne.s32.totalorder %s56, %s57
      %p69 = scmp.eq.s32.totalorder %s31, 1
      %p70 = por %p68, %p69
      %p72 = scmp.ne.s32.totalorder %s57, %s71
      %p73 = scmp.eq.s32.totalorder %s31, 0
      %p74 = por %p72, %p73
      %s75 = ssub.s32 %s25, %s32
      %p76 = scmp.eq.s32.totalorder %s75, 0
      %s78 = sadd.s32 %s77, 1
      %s79 = scalar_select %p76, %s77, %s78
      %p82 = pneg %p76
      %p83 = scmp.eq.s32.totalorder %s25, 1
      %p84 = por %p82, %p83
      %p85 = scmp.ne.s32.totalorder %s77, %s80
      %p86 = scmp.eq.s32.totalorder %s25, 0
      %p87 = por %p85, %p86
      %p88 = scmp.ne.s32.totalorder %s77, %s80
      %p89 = scmp.eq.s32.totalorder %s30, 1
      %p90 = por %p88, %p89
      %p91 = scmp.ne.s32.totalorder %s80, %s81
      %p92 = scmp.eq.s32.totalorder %s30, 0
      %p93 = por %p91, %p92
      %p94 = scmp.ne.s32.totalorder %s80, %s81
      %p95 = scmp.eq.s32.totalorder %s31, 1
      %p96 = por %p94, %p95
      %p98 = scmp.ne.s32.totalorder %s81, %s97
      %p99 = scmp.eq.s32.totalorder %s31, 0
      %p100 = por %p98, %p99
      %s102 = sadd.s32 %s101, 1
      %p105 = scmp.eq.s32.totalorder %s25, 1
      %p106 = scmp.ne.s32.totalorder %s101, %s103
      %p107 = scmp.eq.s32.totalorder %s25, 0
      %p108 = por %p106, %p107
      %p109 = scmp.ne.s32.totalorder %s101, %s103
      %p110 = scmp.eq.s32.totalorder %s30, 1
      %p111 = por %p109, %p110
      %p112 = scmp.ne.s32.totalorder %s103, %s104
      %p113 = scmp.eq.s32.totalorder %s30, 0
      %p114 = por %p112, %p113
      %p115 = scmp.ne.s32.totalorder %s103, %s104
      %p116 = scmp.eq.s32.totalorder %s31, 1
      %p117 = por %p115, %p116
      %p119 = scmp.ne.s32.totalorder %s104, %s118
      %p120 = scmp.eq.s32.totalorder %s31, 0
      %p121 = por %p119, %p120
      %s123 = sadd.s32 %s122, 1
      %p126 = scmp.eq.s32.totalorder %s25, 1
      %p127 = scmp.ne.s32.totalorder %s122, %s124
      %p128 = scmp.eq.s32.totalorder %s25, 0
      %p129 = por %p127, %p128
      %p130 = scmp.ne.s32.totalorder %s122, %s124
      %p131 = scmp.eq.s32.totalorder %s30, 1
      %p132 = por %p130, %p131
      %p133 = scmp.ne.s32.totalorder %s124, %s125
      %p134 = scmp.eq.s32.totalorder %s30, 0
      %p135 = por %p133, %p134
      %p136 = scmp.ne.s32.totalorder %s124, %s125
      %p137 = scmp.eq.s32.totalorder %s31, 1
      %p138 = por %p136, %p137
      %p140 = scmp.ne.s32.totalorder %s125, %s139
      %p141 = scmp.eq.s32.totalorder %s31, 0
      %p142 = por %p140, %p141
      %s144 = sadd.s32 %s143, 1
      %p147 = scmp.eq.s32.totalorder %s25, 1
      %p148 = scmp.ne.s32.totalorder %s143, %s145
      %p149 = scmp.eq.s32.totalorder %s25, 0
      %p150 = por %p148, %p149
      %p151 = scmp.ne.s32.totalorder %s143, %s145
      %p152 = scmp.eq.s32.totalorder %s30, 1
      %p153 = por %p151, %p152
      %p154 = scmp.ne.s32.totalorder %s145, %s146
      %p155 = scmp.eq.s32.totalorder %s30, 0
      %p156 = por %p154, %p155
      %p157 = scmp.ne.s32.totalorder %s145, %s146
      %p158 = scmp.eq.s32.totalorder %s31, 1
      %p159 = por %p157, %p158
      %p161 = scmp.ne.s32.totalorder %s146, %s160
      %p162 = scmp.eq.s32.totalorder %s31, 0
      %p163 = por %p161, %p162
      %s165 = sadd.s32 %s164, 1
      %p168 = scmp.eq.s32.totalorder %s25, 1
      %p169 = scmp.ne.s32.totalorder %s164, %s166
      %p170 = scmp.eq.s32.totalorder %s25, 0
      %p171 = por %p169, %p170
      %p172 = scmp.ne.s32.totalorder %s164, %s166
      %p173 = scmp.eq.s32.totalorder %s30, 1
      %p174 = por %p172, %p173
      %p175 = scmp.ne.s32.totalorder %s166, %s167
      %p176 = scmp.eq.s32.totalorder %s30, 0
      %p177 = por %p175, %p176
      %p178 = scmp.ne.s32.totalorder %s166, %s167
      %p179 = scmp.eq.s32.totalorder %s31, 1
      %p180 = por %p178, %p179
      %p182 = scmp.ne.s32.totalorder %s167, %s181
      %p183 = scmp.eq.s32.totalorder %s31, 0
      %p184 = por %p182, %p183
      %s186 = sadd.s32 %s185, 1
      %p189 = scmp.eq.s32.totalorder %s25, 1
      %p190 = scmp.ne.s32.totalorder %s185, %s187
      %p191 = scmp.eq.s32.totalorder %s25, 0
      %p192 = por %p190, %p191
      %p193 = scmp.ne.s32.totalorder %s185, %s187
      %p194 = scmp.eq.s32.totalorder %s30, 1
      %p195 = por %p193, %p194
      %p196 = scmp.ne.s32.totalorder %s187, %s188
      %p197 = scmp.eq.s32.totalorder %s30, 0
      %p198 = por %p196, %p197
      %p199 = scmp.ne.s32.totalorder %s187, %s188
      %p200 = scmp.eq.s32.totalorder %s31, 1
      %p201 = por %p199, %p200
      %p203 = scmp.ne.s32.totalorder %s188, %s202
      %p204 = scmp.eq.s32.totalorder %s31, 0
      %p205 = por %p203, %p204
      %s207 = sadd.s32 %s206, 1
      %p210 = scmp.eq.s32.totalorder %s25, 1
      %p211 = scmp.ne.s32.totalorder %s206, %s208
      %p212 = scmp.eq.s32.totalorder %s25, 0
      %p213 = por %p211, %p212
      %p214 = scmp.ne.s32.totalorder %s206, %s208
      %p215 = scmp.eq.s32.totalorder %s30, 1
      %p216 = por %p214, %p215
      %p217 = scmp.ne.s32.totalorder %s208, %s209
      %p218 = scmp.eq.s32.totalorder %s30, 0
      %p219 = por %p217, %p218
      %p220 = scmp.ne.s32.totalorder %s208, %s209
      %p221 = scmp.eq.s32.totalorder %s31, 1
      %p222 = por %p220, %p221
      %p224 = scmp.ne.s32.totalorder %s209, %s223
      %p225 = scmp.eq.s32.totalorder %s31, 0
      %p226 = por %p224, %p225
      %s228 = sadd.s32 %s227, 1
      %p231 = scmp.eq.s32.totalorder %s25, 1
      %p232 = scmp.ne.s32.totalorder %s227, %s229
      %p233 = scmp.eq.s32.totalorder %s25, 0
      %p234 = por %p232, %p233
      %p235 = scmp.ne.s32.totalorder %s227, %s229
      %p236 = scmp.eq.s32.totalorder %s30, 1
      %p237 = por %p235, %p236
      %p238 = scmp.ne.s32.totalorder %s229, %s230
      %p239 = scmp.eq.s32.totalorder %s30, 0
      %p240 = por %p238, %p239
      %p241 = scmp.ne.s32.totalorder %s229, %s230
      %p242 = scmp.eq.s32.totalorder %s31, 1
      %p243 = por %p241, %p242
      %p245 = scmp.ne.s32.totalorder %s230, %s244
      %p246 = scmp.eq.s32.totalorder %s31, 0
      %p247 = por %p245, %p246
      %s249 = sadd.s32 %s248, 1
      %p252 = scmp.eq.s32.totalorder %s25, 1
      %p253 = scmp.ne.s32.totalorder %s248, %s250
      %p254 = scmp.eq.s32.totalorder %s25, 0
      %p255 = por %p253, %p254
      %p256 = scmp.ne.s32.totalorder %s248, %s250
      %p257 = scmp.eq.s32.totalorder %s30, 1
      %p258 = por %p256, %p257
      %p259 = scmp.ne.s32.totalorder %s250, %s251
      %p260 = scmp.eq.s32.totalorder %s30, 0
      %p261 = por %p259, %p260
      %p262 = scmp.ne.s32.totalorder %s250, %s251
      %p263 = scmp.eq.s32.totalorder %s31, 1
      %p264 = por %p262, %p263
      %p266 = scmp.ne.s32.totalorder %s251, %s265
      %p267 = scmp.eq.s32.totalorder %s31, 0
      %p268 = por %p266, %p267
      %s270 = sadd.s32 %s269, 1
      %p273 = scmp.eq.s32.totalorder %s25, 1
      %p274 = scmp.ne.s32.totalorder %s269, %s271
      %p275 = scmp.eq.s32.totalorder %s25, 0
      %p276 = por %p274, %p275
      %p277 = scmp.ne.s32.totalorder %s269, %s271
      %p278 = scmp.eq.s32.totalorder %s30, 1
      %p279 = por %p277, %p278
      %p280 = scmp.ne.s32.totalorder %s271, %s272
      %p281 = scmp.eq.s32.totalorder %s30, 0
      %p282 = por %p280, %p281
      %p283 = scmp.ne.s32.totalorder %s271, %s272
      %p284 = scmp.eq.s32.totalorder %s31, 1
      %p285 = por %p283, %p284
      %p287 = scmp.ne.s32.totalorder %s272, %s286
      %p288 = scmp.eq.s32.totalorder %s31, 0
      %p289 = por %p287, %p288
      %s291 = sadd.s32 %s290, 1
      %p294 = scmp.eq.s32.totalorder %s25, 1
      %p295 = scmp.ne.s32.totalorder %s290, %s292
      %p296 = scmp.eq.s32.totalorder %s25, 0
      %p297 = por %p295, %p296
      %p298 = scmp.ne.s32.totalorder %s290, %s292
      %p299 = scmp.eq.s32.totalorder %s30, 1
      %p300 = por %p298, %p299
      %p301 = scmp.ne.s32.totalorder %s292, %s293
      %p302 = scmp.eq.s32.totalorder %s30, 0
      %p303 = por %p301, %p302
      %p304 = scmp.ne.s32.totalorder %s292, %s293
      %p305 = scmp.eq.s32.totalorder %s31, 1
      %p306 = por %p304, %p305
      %p308 = scmp.ne.s32.totalorder %s293, %s307
      %p309 = scmp.eq.s32.totalorder %s31, 0
      %p310 = por %p308, %p309
      %p311 = scmp.le.s32.totalorder 1, %s25
      %p312 = scmp.lt.s32.totalorder %s25, 3
      %p313 = pnand %p311, %p312
      %p314 = pneg %p313
      // Predicated region
      $region9: #{tpu_custom_call.1} parent=5 // pred_check
        _
      $region10: #{tpu_custom_call.1} parent=5 // pred_check_branch
        %316 = sbr.rel (%p313) target = $region12
      $region11: #{tpu_custom_call.1} parent=5 // pred_region
        %s317 = ssub.s32 %s25, 1
        // Predicated region
        $region13: #{tpu_custom_call.1} parent=11 // pred_check
          %p318 = pneg %p46
        $region14: #{tpu_custom_call.1} parent=11 // pred_check_branch
          %320 = sbr.rel (%p318) target = $region16
        $region15: #{tpu_custom_call.1} parent=11 // pred_region
          %s322 = ssub.s32 128, 128
          %323 = vsyncadd [#allocation7], %s322
          %s325 = sshll.u32 [#allocation6], 4
          %s326 = int_to_ptr.vmem [resolvable:$true] %s325
          %328 = dma.hbm_to_vmem [thread:$0]  %s0, 128, %s326, [#allocation7]
        $region16: #{tpu_custom_call.1} parent=11 // pred_fallthru
          _
        // Predicated region
        $region17: #{tpu_custom_call.1} parent=11 // pred_check
          %p329 = pneg %p67
        $region18: #{tpu_custom_call.1} parent=11 // pred_check_branch
          %331 = sbr.rel (%p329) target = $region20
        $region19: #{tpu_custom_call.1} parent=11 // pred_region
          %s333 = ssub.s32 128, 128
          %334 = vsyncadd [#allocation10], %s333
          %s336 = sshll.u32 [#allocation9], 4
          %s337 = int_to_ptr.vmem [resolvable:$true] %s336
          %339 = dma.hbm_to_vmem [thread:$0]  %s1, 128, %s337, [#allocation10]
        $region20: #{tpu_custom_call.1} parent=11 // pred_fallthru
          _
        // Predicated region
        $region21: #{tpu_custom_call.1} parent=11 // pred_check
          %p340 = pneg %p114
        $region22: #{tpu_custom_call.1} parent=11 // pred_check_branch
          %342 = sbr.rel (%p340) target = $region24
        $region23: #{tpu_custom_call.1} parent=11 // pred_region
          %s344 = ssub.s32 2048, 2048
          %345 = vsyncadd [#allocation10], %s344
          %s346 = sshll.u32 [#allocation12], 4
          %s347 = int_to_ptr.vmem [resolvable:$true] %s346
          %352 = dma.hbm_to_vmem [thread:$0]  %s3, 2048, %s347, [#allocation10], 128, 128, 8
        $region24: #{tpu_custom_call.1} parent=11 // pred_fallthru
          _
        // Predicated region
        $region25: #{tpu_custom_call.1} parent=11 // pred_check
          %p353 = pneg %p135
        $region26: #{tpu_custom_call.1} parent=11 // pred_check_branch
          %355 = sbr.rel (%p353) target = $region28
        $region27: #{tpu_custom_call.1} parent=11 // pred_region
          %s357 = ssub.s32 256, 256
          %358 = vsyncadd [#allocation14], %s357
          %s359 = sshll.u32 [#allocation13], 4
          %s360 = int_to_ptr.vmem [resolvable:$true] %s359
          %365 = dma.hbm_to_vmem [thread:$0]  %s4, 256, %s360, [#allocation14], 64, 64, 4
        $region28: #{tpu_custom_call.1} parent=11 // pred_fallthru
          _
        // Predicated region
        $region29: #{tpu_custom_call.1} parent=11 // pred_check
          %p366 = pneg %p156
        $region30: #{tpu_custom_call.1} parent=11 // pred_check_branch
          %368 = sbr.rel (%p366) target = $region32
        $region31: #{tpu_custom_call.1} parent=11 // pred_region
          _
        $region32: #{tpu_custom_call.1} parent=11 // pred_fallthru
          _
        // Predicated region
        $region33: #{tpu_custom_call.1} parent=11 // pred_check
          %p369 = pneg %p177
        $region34: #{tpu_custom_call.1} parent=11 // pred_check_branch
          %371 = sbr.rel (%p369) target = $region36
        $region35: #{tpu_custom_call.1} parent=11 // pred_region
          _
        $region36: #{tpu_custom_call.1} parent=11 // pred_fallthru
          _
        // Predicated region
        $region37: #{tpu_custom_call.1} parent=11 // pred_check
          %p372 = pneg %p198
        $region38: #{tpu_custom_call.1} parent=11 // pred_check_branch
          %374 = sbr.rel (%p372) target = $region40
        $region39: #{tpu_custom_call.1} parent=11 // pred_region
          %s376 = ssub.s32 768, 768
          %377 = vsyncadd [#allocation14], %s376
          %s378 = sshll.u32 [#allocation15], 4
          %s379 = int_to_ptr.vmem [resolvable:$true] %s378
          %384 = dma.hbm_to_vmem [thread:$0]  %s7, 768, %s379, [#allocation14], 64, 64, 4
        $region40: #{tpu_custom_call.1} parent=11 // pred_fallthru
          _
        // Predicated region
        $region41: #{tpu_custom_call.1} parent=11 // pred_check
          %p385 = pneg %p219
        $region42: #{tpu_custom_call.1} parent=11 // pred_check_branch
          %387 = sbr.rel (%p385) target = $region44
        $region43: #{tpu_custom_call.1} parent=11 // pred_region
          %s389 = ssub.s32 3072, 3072
          %390 = vsyncadd [#allocation17], %s389
          %s391 = sshll.u32 [#allocation16], 4
          %s392 = int_to_ptr.vmem [resolvable:$true] %s391
          %397 = dma.hbm_to_vmem [thread:$0]  %s8, 3072, %s392, [#allocation17], 64, 64, 4
        $region44: #{tpu_custom_call.1} parent=11 // pred_fallthru
          _
        // Predicated region
        $region45: #{tpu_custom_call.1} parent=11 // pred_check
          %p398 = pneg %p240
        $region46: #{tpu_custom_call.1} parent=11 // pred_check_branch
          %400 = sbr.rel (%p398) target = $region48
        $region47: #{tpu_custom_call.1} parent=11 // pred_region
          _
        $region48: #{tpu_custom_call.1} parent=11 // pred_fallthru
          _
        // Predicated region
        $region49: #{tpu_custom_call.1} parent=11 // pred_check
          %p401 = pneg %p261
        $region50: #{tpu_custom_call.1} parent=11 // pred_check_branch
          %403 = sbr.rel (%p401) target = $region52
        $region51: #{tpu_custom_call.1} parent=11 // pred_region
          _
        $region52: #{tpu_custom_call.1} parent=11 // pred_fallthru
          _
      $region12: #{tpu_custom_call.1} parent=5 // pred_fallthru
        _
      %p404 = scmp.lt.s32.totalorder %s25, 2
      // Predicated region
      $region53: #{tpu_custom_call.1} parent=5 // pred_check
        %p405 = pneg %p404
      $region54: #{tpu_custom_call.1} parent=5 // pred_check_branch
        %407 = sbr.rel (%p405) target = $region56
      $region55: #{tpu_custom_call.1} parent=5 // pred_region
        // Predicated region
        $region57: #{tpu_custom_call.1} parent=55 // pred_check
          %p408 = pneg %p87
        $region58: #{tpu_custom_call.1} parent=55 // pred_check_branch
          %410 = sbr.rel (%p408) target = $region60
        $region59: #{tpu_custom_call.1} parent=55 // pred_region
          %s411 = sand.u32 %s25, 1
          %s412 = scalar_lea.sflag [#allocation7], %s411
          %s413 = sand.u32 %s77, 1
          %s414 = smul.addr %s413, 32
          %s415 = scalar_lea.vmem [#allocation11], %s414
          %s416 = smul.u32 8, %s25
          %s418 = ssub.s32 512, 512
          %419 = vsyncadd %s412, %s418
          %s420 = smul.addr %s416, 64
          %s421 = scalar_lea.hbm %s2, %s420
          %s422 = sshll.u32 %s415, 4
          %s423 = int_to_ptr.vmem [resolvable:$true] %s422
          %428 = dma.hbm_to_vmem [thread:$0]  %s421, 512, %s423, %s412, 64, 64, 4
        $region60: #{tpu_custom_call.1} parent=55 // pred_fallthru
          _
      $region56: #{tpu_custom_call.1} parent=5 // pred_fallthru
        _
      %p429 = scmp.le.s32.totalorder 1, %s25
      %p430 = scmp.lt.s32.totalorder %s25, 3
      %p431 = pnand %p429, %p430
      %p432 = pneg %p431
      // Predicated region
      $region61: #{tpu_custom_call.1} parent=5 // pred_check
        _
      $region62: #{tpu_custom_call.1} parent=5 // pred_check_branch
        %434 = sbr.rel (%p431) target = $region64
      $region63: #{tpu_custom_call.1} parent=5 // pred_region
        %s435 = ssub.s32 %s25, 1
        // Predicated region
        $region65: #{tpu_custom_call.1} parent=63 // pred_check
          %p436 = pneg %p46
        $region66: #{tpu_custom_call.1} parent=63 // pred_check_branch
          %438 = sbr.rel (%p436) target = $region68
        $region67: #{tpu_custom_call.1} parent=63 // pred_region
          %439 = dma.done [#allocation7], 128
        $region68: #{tpu_custom_call.1} parent=63 // pred_fallthru
          _
        // Predicated region
        $region69: #{tpu_custom_call.1} parent=63 // pred_check
          %p440 = pneg %p67
        $region70: #{tpu_custom_call.1} parent=63 // pred_check_branch
          %442 = sbr.rel (%p440) target = $region72
        $region71: #{tpu_custom_call.1} parent=63 // pred_region
          %443 = dma.done [#allocation10], 128
        $region72: #{tpu_custom_call.1} parent=63 // pred_fallthru
          _
        %s444 = sand.u32 %s30, 1
        %s445 = scalar_lea.sflag [#allocation7], %s444
        %s446 = sand.u32 %s80, 1
        %s447 = smul.addr %s446, 32
        %s448 = scalar_lea.vmem [#allocation11], %s447
        // Predicated region
        $region73: #{tpu_custom_call.1} parent=63 // pred_check
          %p449 = pneg %p93
        $region74: #{tpu_custom_call.1} parent=63 // pred_check_branch
          %451 = sbr.rel (%p449) target = $region76
        $region75: #{tpu_custom_call.1} parent=63 // pred_region
          %452 = dma.done %s445, 512
        $region76: #{tpu_custom_call.1} parent=63 // pred_fallthru
          _
        // Predicated region
        $region77: #{tpu_custom_call.1} parent=63 // pred_check
          %p453 = pneg %p114
        $region78: #{tpu_custom_call.1} parent=63 // pred_check_branch
          %455 = sbr.rel (%p453) target = $region80
        $region79: #{tpu_custom_call.1} parent=63 // pred_region
          %456 = dma.done [#allocation10], 2048
        $region80: #{tpu_custom_call.1} parent=63 // pred_fallthru
          _
        // Predicated region
        $region81: #{tpu_custom_call.1} parent=63 // pred_check
          %p457 = pneg %p135
        $region82: #{tpu_custom_call.1} parent=63 // pred_check_branch
          %459 = sbr.rel (%p457) target = $region84
        $region83: #{tpu_custom_call.1} parent=63 // pred_region
          %460 = dma.done [#allocation14], 256
        $region84: #{tpu_custom_call.1} parent=63 // pred_fallthru
          _
        // Predicated region
        $region85: #{tpu_custom_call.1} parent=63 // pred_check
          %p461 = pneg %p198
        $region86: #{tpu_custom_call.1} parent=63 // pred_check_branch
          %463 = sbr.rel (%p461) target = $region88
        $region87: #{tpu_custom_call.1} parent=63 // pred_region
          %464 = dma.done [#allocation14], 768
        $region88: #{tpu_custom_call.1} parent=63 // pred_fallthru
          _
        // Predicated region
        $region89: #{tpu_custom_call.1} parent=63 // pred_check
          %p465 = pneg %p219
        $region90: #{tpu_custom_call.1} parent=63 // pred_check_branch
          %467 = sbr.rel (%p465) target = $region92
        $region91: #{tpu_custom_call.1} parent=63 // pred_region
          %468 = dma.done [#allocation17], 3072
        $region92: #{tpu_custom_call.1} parent=63 // pred_fallthru
          _
        %p469 = pneg %p46
        %p470 = pneg %p43
        %p471 = pneg %p67
        %p472 = pneg %p64
        %s473 = sand.u32 %s30, 1
        %s474 = scalar_lea.sflag [#allocation7], %s473
        %s475 = sand.u32 %s80, 1
        %s476 = smul.addr %s475, 32
        %s477 = scalar_lea.vmem [#allocation11], %s476
        %p478 = pneg %p93
        %p479 = pneg %p90
        %p480 = pneg %p114
        %p481 = pneg %p111
        %p482 = pneg %p135
        %p483 = pneg %p132
        %p484 = pneg %p156
        %p485 = pneg %p153
        %p486 = pneg %p177
        %p487 = pneg %p174
        %p488 = pneg %p198
        %p489 = pneg %p195
        %p490 = pneg %p219
        %p491 = pneg %p216
        %p492 = pneg %p240
        %p493 = pneg %p237
        %p494 = pneg %p261
        %p495 = pneg %p258
        %p496 = pneg %p282
        %p497 = pneg %p279
        %p498 = pneg %p303
        %p499 = pneg %p300
        %s500 = smul.u32 8, %s30
        %p502 = scmp.eq.s32.totalorder %s30, 0
        // Predicated region
        $region93: #{tpu_custom_call.1} parent=63 // pred_check
          %p503 = pneg %p502
        $region94: #{tpu_custom_call.1} parent=63 // pred_check_branch
          %505 = sbr.rel (%p503) target = $region96
        $region95: #{tpu_custom_call.1} parent=63 // pred_region
          %v506 = vld [vmem:[#allocation9] sm:$0xff]
          %v507 = vld [vmem:[#allocation12] sm:$0xff]
          %v508 = vld [vmem:[#allocation12 + $0x8] sm:$0xff]
          %v509 = vld [vmem:[#allocation12 + $0x10] sm:$0xff]
          %v510 = vld [vmem:[#allocation12 + $0x18] sm:$0xff]
          %v511 = vld [vmem:[#allocation12 + $0x20] sm:$0xff]
          %v512 = vld [vmem:[#allocation12 + $0x28] sm:$0xff]
          %v513 = vld [vmem:[#allocation12 + $0x30] sm:$0xff]
          %v514 = vld [vmem:[#allocation12 + $0x38] sm:$0xff]
          %v515 = vld [vmem:[#allocation12 + $0x40] sm:$0xff]
          %v516 = vld [vmem:[#allocation12 + $0x48] sm:$0xff]
          %v517 = vld [vmem:[#allocation12 + $0x50] sm:$0xff]
          %v518 = vld [vmem:[#allocation12 + $0x58] sm:$0xff]
          %v519 = vld [vmem:[#allocation12 + $0x60] sm:$0xff]
          %v520 = vld [vmem:[#allocation12 + $0x68] sm:$0xff]
          %v521 = vld [vmem:[#allocation12 + $0x70] sm:$0xff]
          %v522 = vld [vmem:[#allocation12 + $0x78] sm:$0xff]
          %v523 = vld [vmem:[%s5] sm:$0x1]
          %v525 = vlaneseq
          %v526 = vshrl.u32 %v525, 7
          %v527 = vsub.s32 0, %v526
          %v528 = vrot.slane %v523, %v527
          %530 = vmatprep.subr.mxu0 0.0
          %531 = vmatpush1.msra.mxu0 %v507
          %532 = vmatprep.subr.mxu0 0.0
          %533 = vmatpush1.msra.mxu0 %v508
          %534 = vmatprep.subr.mxu0 0.0
          %535 = vmatpush1.msra.mxu0 %v509
          %536 = vmatprep.subr.mxu0 0.0
          %537 = vmatpush1.msra.mxu0 %v510
          %538 = vmatprep.subr.mxu0 0.0
          %539 = vmatpush1.msra.mxu0 %v511
          %540 = vmatprep.subr.mxu0 0.0
          %541 = vmatpush1.msra.mxu0 %v512
          %542 = vmatprep.subr.mxu0 0.0
          %543 = vmatpush1.msra.mxu0 %v513
          %544 = vmatprep.subr.mxu0 0.0
          %545 = vmatpush1.msra.mxu0 %v514
          %546 = vmatprep.subr.mxu0 0.0
          %547 = vmatpush1.msra.mxu0 %v515
          %548 = vmatprep.subr.mxu0 0.0
          %549 = vmatpush1.msra.mxu0 %v516
          %550 = vmatprep.subr.mxu0 0.0
          %551 = vmatpush1.msra.mxu0 %v517
          %552 = vmatprep.subr.mxu0 0.0
          %553 = vmatpush1.msra.mxu0 %v518
          %554 = vmatprep.subr.mxu0 0.0
          %555 = vmatpush1.msra.mxu0 %v519
          %556 = vmatprep.subr.mxu0 0.0
          %557 = vmatpush1.msra.mxu0 %v520
          %558 = vmatprep.subr.mxu0 0.0
          %559 = vmatpush1.msra.mxu0 %v521
          %560 = vmatprep.subr.mxu0 0.0
          %561 = vmatpush1.msra.mxu0 %v522
          %562 = vmatprep.subr.mxu0 0.0
          %563 = vmatpush1.msra.mxu0 0.0
          %564 = vmatprep.subr.mxu0 0.0
          %565 = vmatpush1.msra.mxu0 0.0
          %566 = vmatprep.subr.mxu0 0.0
          %567 = vmatpush1.msra.mxu0 0.0
          %568 = vmatprep.subr.mxu0 0.0
          %569 = vmatpush1.msra.mxu0 0.0
          %570 = vmatprep.subr.mxu0 0.0
          %571 = vmatpush1.msra.mxu0 0.0
          %572 = vmatprep.subr.mxu0 0.0
          %573 = vmatpush1.msra.mxu0 0.0
          %574 = vmatprep.subr.mxu0 0.0
          %575 = vmatpush1.msra.mxu0 0.0
          %576 = vmatprep.subr.mxu0 0.0
          %577 = vmatpush1.msra.mxu0 0.0
          %578 = vmatprep.subr.mxu0 0.0
          %579 = vmatpush1.msra.mxu0 0.0
          %580 = vmatprep.subr.mxu0 0.0
          %581 = vmatpush1.msra.mxu0 0.0
          %582 = vmatprep.subr.mxu0 0.0
          %583 = vmatpush1.msra.mxu0 0.0
          %584 = vmatprep.subr.mxu0 0.0
          %585 = vmatpush1.msra.mxu0 0.0
          %586 = vmatprep.subr.mxu0 0.0
          %587 = vmatpush1.msra.mxu0 0.0
          %588 = vmatprep.subr.mxu0 0.0
          %589 = vmatpush1.msra.mxu0 0.0
          %590 = vmatprep.subr.mxu0 0.0
          %591 = vmatpush1.msra.mxu0 0.0
          %592 = vmatprep.subr.mxu0 0.0
          %593 = vmatpush1.msra.mxu0 0.0
          %594 = vmatprep.mubr.f32.mxu0 0.0
          %595 = vmatmul.mubr.f32.gmra.mrb[0].mxu0 %v506
          %v596 = vpop.f32.mrb[0].mxu0
          %v597 = vadd.f32 %v528, %v596
          %v598 = vpop.f32.mrb[0].mxu0
          %599 = vdwg.mxu0
          %600 = vst [vmem:[#allocation2] sm:$0xff] %v597
          %vm601 = vcmask 57344
          %602 = vst.msk [vmem:[#allocation3] sm:$0x1] %vm601, -1e+30
          %603 = vst.msk [vmem:[#allocation4] sm:$0x1] %vm601, 0.0
          %vm604 = vcmask 261120
          %605 = vst.msk [vmem:[#allocation5] sm:$0xff] %vm604, 0.0
        $region96: #{tpu_custom_call.1} parent=63 // pred_fallthru
          _
        %v606 = vld [vmem:[%s448] sm:$0xf]
        %v607 = vld [vmem:[%s448 + $0x4] sm:$0xf]
        %v608 = vld [vmem:[%s448 + $0x8] sm:$0xf]
        %v609 = vld [vmem:[%s448 + $0xc] sm:$0xf]
        %v610 = vld [vmem:[%s448 + $0x10] sm:$0xf]
        %v611 = vld [vmem:[%s448 + $0x14] sm:$0xf]
        %v612 = vld [vmem:[%s448 + $0x18] sm:$0xf]
        %v613 = vld [vmem:[%s448 + $0x1c] sm:$0xf]
        %v614 = vld [vmem:[#allocation13] sm:$0xf]
        %v615 = vld [vmem:[#allocation13 + $0x4] sm:$0xf]
        %v616 = vld [vmem:[#allocation13 + $0x8] sm:$0xf]
        %v617 = vld [vmem:[#allocation13 + $0xc] sm:$0xf]
        %v626 = vunpack.c.l.b16 %v606
        %v627 = vunpack.c.l.b16 %v607
        %v628 = vunpack.c.l.b16 %v608
        %v629 = vunpack.c.l.b16 %v609
        %v630 = vunpack.c.l.b16 %v610
        %v631 = vunpack.c.l.b16 %v611
        %v632 = vunpack.c.l.b16 %v612
        %v633 = vunpack.c.l.b16 %v613
        %v634 = vpack.c.b16 %v627, %v626
        %v635 = vpack.c.b16 %v629, %v628
        %v636 = vpack.c.b16 %v631, %v630
        %v637 = vpack.c.b16 %v633, %v632
        %v642 = vunpack.c.l.b16 %v614
        %v643 = vunpack.c.l.b16 %v615
        %v644 = vunpack.c.l.b16 %v616
        %v645 = vunpack.c.l.b16 %v617
        %v646 = vpack.c.b16 %v643, %v642
        %v647 = vpack.c.b16 %v645, %v644
        %vm650 = vcmask 261120
        %v652 = vsel %vm650, %v634, 0
        %v655 = vsel %vm650, %v635, 0
        %v658 = vsel %vm650, %v636, 0
        %v661 = vsel %vm650, %v637, 0
        %663 = vmatprep.subr.bf16.mxu0 0
        %664 = vmatpush1.bf16.msra.mxu0 %v646
        %665 = vmatprep.subr.bf16.mxu0 0
        %666 = vmatpush1.bf16.msra.mxu0 %v647
        %667 = vmatprep.subr.bf16.mxu0 0
        %668 = vmatpush1.bf16.msra.mxu0 0
        %669 = vmatprep.subr.bf16.mxu0 0
        %670 = vmatpush1.bf16.msra.mxu0 0
        %671 = vmatprep.subr.bf16.mxu0 0
        %672 = vmatpush1.bf16.msra.mxu0 0
        %673 = vmatprep.subr.bf16.mxu0 0
        %674 = vmatpush1.bf16.msra.mxu0 0
        %675 = vmatprep.subr.bf16.mxu0 0
        %676 = vmatpush1.bf16.msra.mxu0 0
        %677 = vmatprep.subr.bf16.mxu0 0
        %678 = vmatpush1.bf16.msra.mxu0 0
        %679 = vmatprep.subr.bf16.mxu0 0
        %680 = vmatpush1.bf16.msra.mxu0 0
        %681 = vmatprep.subr.bf16.mxu0 0
        %682 = vmatpush1.bf16.msra.mxu0 0
        %683 = vmatprep.subr.bf16.mxu0 0
        %684 = vmatpush1.bf16.msra.mxu0 0
        %685 = vmatprep.subr.bf16.mxu0 0
        %686 = vmatpush1.bf16.msra.mxu0 0
        %687 = vmatprep.subr.bf16.mxu0 0
        %688 = vmatpush1.bf16.msra.mxu0 0
        %689 = vmatprep.subr.bf16.mxu0 0
        %690 = vmatpush1.bf16.msra.mxu0 0
        %691 = vmatprep.subr.bf16.mxu0 0
        %692 = vmatpush1.bf16.msra.mxu0 0
        %693 = vmatprep.subr.bf16.mxu0 0
        %694 = vmatpush1.bf16.msra.mxu0 0
        %695 = vmatprep.mubr.bf16.mxu0 0
        %696 = vmatmul.mubr.bf16.gmra.mrb[0].mxu0 %v652
        %v697 = vpop.f32.mrb[0].mxu0
        %v698 = vadd.f32 0.0, %v697
        %v699 = vpop.f32.mrb[0].mxu0
        %v700 = vpop.f32.mrb[0].mxu0
        %v701 = vadd.f32 0.0, %v700
        %v702 = vpop.f32.mrb[0].mxu0
        %703 = vmatprep.mubr.bf16.mxu0 0
        %704 = vmatmul.mubr.bf16.gmra.mrb[0].mxu0 %v655
        %v705 = vpop.f32.mrb[0].mxu0
        %v706 = vadd.f32 0.0, %v705
        %v707 = vpop.f32.mrb[0].mxu0
        %v708 = vpop.f32.mrb[0].mxu0
        %v709 = vadd.f32 0.0, %v708
        %v710 = vpop.f32.mrb[0].mxu0
        %711 = vmatprep.mubr.bf16.mxu0 0
        %712 = vmatmul.mubr.bf16.gmra.mrb[0].mxu0 %v658
        %v713 = vpop.f32.mrb[0].mxu0
        %v714 = vadd.f32 0.0, %v713
        %v715 = vpop.f32.mrb[0].mxu0
        %v716 = vpop.f32.mrb[0].mxu0
        %v717 = vadd.f32 0.0, %v716
        %v718 = vpop.f32.mrb[0].mxu0
        %719 = vmatprep.mubr.bf16.mxu0 0
        %720 = vmatmul.mubr.bf16.gmra.mrb[0].mxu0 %v661
        %v721 = vpop.f32.mrb[0].mxu0
        %v722 = vadd.f32 0.0, %v721
        %v723 = vpop.f32.mrb[0].mxu0
        %v724 = vpop.f32.mrb[0].mxu0
        %v725 = vadd.f32 0.0, %v724
        %v726 = vpop.f32.mrb[0].mxu0
        %727 = vdwg.mxu0
        %v728 = vld [vmem:[#allocation2] sm:$0xff]
        %v729 = vadd.f32 %v728, %v698
        %v730 = vadd.f32 %v728, %v701
        %v731 = vadd.f32 %v728, %v706
        %v732 = vadd.f32 %v728, %v709
        %v733 = vadd.f32 %v728, %v714
        %v734 = vadd.f32 %v728, %v717
        %v735 = vadd.f32 %v728, %v722
        %v736 = vadd.f32 %v728, %v725
        %v737 = vtanh.pop %v729
        %v738 = vtanh.pop %v730
        %v739 = vtanh.pop %v731
        %v740 = vtanh.pop %v732
        %v741 = vtanh.pop %v733
        %v742 = vtanh.pop %v734
        %v743 = vtanh.pop %v735
        %v744 = vtanh.pop %v736
        %745 = vadd.xlane.f32.xlu0 %v737
        %v746 = vpop.xlane.xlu0 %745
        %747 = vadd.xlane.f32.xlu0 %v738
        %v748 = vpop.xlane.xlu0 %747
        %749 = vadd.xlane.f32.xlu0 %v739
        %v750 = vpop.xlane.xlu0 %749
        %751 = vadd.xlane.f32.xlu0 %v740
        %v752 = vpop.xlane.xlu0 %751
        %753 = vadd.xlane.f32.xlu0 %v741
        %v754 = vpop.xlane.xlu0 %753
        %755 = vadd.xlane.f32.xlu0 %v742
        %v756 = vpop.xlane.xlu0 %755
        %757 = vadd.xlane.f32.xlu0 %v743
        %v758 = vpop.xlane.xlu0 %757
        %759 = vadd.xlane.f32.xlu0 %v744
        %v760 = vpop.xlane.xlu0 %759
        %v761 = vlaneseq
        %v762 = vshrl.u32 %v761, 7
        %s763 = smul.u32 %s30, 8
        %v764 = vstv %s763
        %v765 = vadd.s32 %v762, %v764
        %vm766 = vcmp.lt.s32.totalorder %v765, 13
        %v775 = vlaneseq
        %v776 = vand.u32 %v775, 127
        %v777 = vlaneseq
        %v778 = vshrl.u32 %v777, 7
        %v779 = vsub.s32 %v776, %v778
        %v780 = vrot.slane %v746, %v779
        %v781 = vlaneseq
        %v782 = vshrl.u32 %v781, 7
        %v783 = vsub.s32 %v776, %v782
        %v784 = vrot.slane %v748, %v783
        %v785 = vlaneseq
        %v786 = vshrl.u32 %v785, 7
        %v787 = vsub.s32 %v776, %v786
        %v788 = vrot.slane %v750, %v787
        %v789 = vlaneseq
        %v790 = vshrl.u32 %v789, 7
        %v791 = vsub.s32 %v776, %v790
        %v792 = vrot.slane %v752, %v791
        %v793 = vlaneseq
        %v794 = vshrl.u32 %v793, 7
        %v795 = vsub.s32 %v776, %v794
        %v796 = vrot.slane %v754, %v795
        %v797 = vlaneseq
        %v798 = vshrl.u32 %v797, 7
        %v799 = vsub.s32 %v776, %v798
        %v800 = vrot.slane %v756, %v799
        %v801 = vlaneseq
        %v802 = vshrl.u32 %v801, 7
        %v803 = vsub.s32 %v776, %v802
        %v804 = vrot.slane %v758, %v803
        %v805 = vlaneseq
        %v806 = vshrl.u32 %v805, 7
        %v807 = vsub.s32 %v776, %v806
        %v808 = vrot.slane %v760, %v807
        %vm809 = vcmask 1041409
        %v810 = vsel %vm809, %v784, %v780
        %vm811 = vcmask 1042434
        %v812 = vsel %vm811, %v788, %v810
        %vm813 = vcmask 1043459
        %v814 = vsel %vm813, %v792, %v812
        %vm815 = vcmask 1044484
        %v816 = vsel %vm815, %v796, %v814
        %vm817 = vcmask 1045509
        %v818 = vsel %vm817, %v800, %v816
        %vm819 = vcmask 1046534
        %v820 = vsel %vm819, %v804, %v818
        %vm821 = vcmask 1047559
        %v822 = vsel %vm821, %v808, %v820
        %v824 = vsel %vm766, %v822, -1e+30
        %v825 = vld [vmem:[#allocation3] sm:$0x1]
        %vm826 = vcmask 64512
        %v827 = vsel %vm826, %v824, -inf
        %v828 = vrot.slane %v827, 4
        %v829 = vmax.f32 %v827, %v828
        %v830 = vrot.slane %v829, 2
        %v831 = vmax.f32 %v829, %v830
        %v832 = vrot.slane %v831, 1
        %v833 = vmax.f32 %v831, %v832
        %v834 = vmax.f32 %v825, %v833
        %v835 = vsub.f32 %v825, %v834
        %v836 = vmul.f32 %v835, 1.442695
        %v837 = vpow.pop %v836
        %v839 = vlaneseq
        %v840 = vshrl.u32 %v839, 7
        %v841 = vsub.s32 0, %v840
        %v842 = vrot.slane %v834, %v841
        %v844 = vsub.f32 %v824, %v842
        %v845 = vmul.f32 %v844, 1.442695
        %v846 = vpow.pop %v845
        %v847 = vld [vmem:[#allocation4] sm:$0x1]
        %v848 = vmul.f32 %v837, %v847
        %v849 = vsel %vm826, %v846, 0.0
        %v850 = vrot.slane %v849, 4
        %v851 = vadd.f32 %v849, %v850
        %v852 = vrot.slane %v851, 2
        %v853 = vadd.f32 %v851, %v852
        %v854 = vrot.slane %v853, 1
        %v855 = vadd.f32 %v853, %v854
        %v856 = vadd.f32 %v848, %v855
        %vm857 = vcmask 57344
        %858 = vst.msk [vmem:[#allocation4] sm:$0x1] %vm857, %v856
        %v859 = vld [vmem:[#allocation5] sm:$0xff]
        %vm860 = vcmp.eq.s32.totalorder %v762, %v776
        %v862 = vlaneseq
        %v863 = vshrl.u32 %v862, 7
        %v864 = vsub.s32 0, %v863
        %v865 = vrot.slane %v837, %v864
        %v867 = vsel %vm860, %v865, 0.0
        %v868 = vsel %vm826, %v867, 0.0
        %869 = vadd.xlane.f32.xlu0 %v868
        %v870 = vpop.xlane.xlu0 %869
        %v871 = vmul.f32 %v859, %v870
        %v872 = vlaneseq
        %v873 = vshrl.u32 %v872, 7
        %v874 = vsub.s32 0, %v873
        %v875 = vrot.slane %v846, %v874
        %877 = vbcast.lane.b32.xlu0 %v875, 256
        %v878 = vpop.permute.xlu0 %877
        %v879 = vlaneseq
        %v880 = vshrl.u32 %v879, 7
        %v881 = vsub.s32 1, %v880
        %v882 = vrot.slane %v846, %v881
        %884 = vbcast.lane.b32.xlu0 %v882, 256
        %v885 = vpop.permute.xlu0 %884
        %v886 = vlaneseq
        %v887 = vshrl.u32 %v886, 7
        %v888 = vsub.s32 2, %v887
        %v889 = vrot.slane %v846, %v888
        %891 = vbcast.lane.b32.xlu0 %v889, 256
        %v892 = vpop.permute.xlu0 %891
        %v893 = vlaneseq
        %v894 = vshrl.u32 %v893, 7
        %v895 = vsub.s32 3, %v894
        %v896 = vrot.slane %v846, %v895
        %898 = vbcast.lane.b32.xlu0 %v896, 256
        %v899 = vpop.permute.xlu0 %898
        %v900 = vlaneseq
        %v901 = vshrl.u32 %v900, 7
        %v902 = vsub.s32 4, %v901
        %v903 = vrot.slane %v846, %v902
        %905 = vbcast.lane.b32.xlu0 %v903, 256
        %v906 = vpop.permute.xlu0 %905
        %v907 = vlaneseq
        %v908 = vshrl.u32 %v907, 7
        %v909 = vsub.s32 5, %v908
        %v910 = vrot.slane %v846, %v909
        %912 = vbcast.lane.b32.xlu0 %v910, 256
        %v913 = vpop.permute.xlu0 %912
        %v914 = vlaneseq
        %v915 = vshrl.u32 %v914, 7
        %v916 = vsub.s32 6, %v915
        %v917 = vrot.slane %v846, %v916
        %919 = vbcast.lane.b32.xlu0 %v917, 256
        %v920 = vpop.permute.xlu0 %919
        %v921 = vlaneseq
        %v922 = vshrl.u32 %v921, 7
        %v923 = vsub.s32 7, %v922
        %v924 = vrot.slane %v846, %v923
        %926 = vbcast.lane.b32.xlu0 %v924, 256
        %v927 = vpop.permute.xlu0 %926
        %v928 = vunpack.c.l.bf16 %v606
        %v929 = vunpack.c.l.bf16 %v607
        %v930 = vunpack.c.l.bf16 %v608
        %v931 = vunpack.c.l.bf16 %v609
        %v932 = vunpack.c.l.bf16 %v610
        %v933 = vunpack.c.l.bf16 %v611
        %v934 = vunpack.c.l.bf16 %v612
        %v935 = vunpack.c.l.bf16 %v613
        %v936 = vmul.f32 %v878, %v928
        %v937 = vmul.f32 %v885, %v929
        %v938 = vmul.f32 %v892, %v930
        %v939 = vmul.f32 %v899, %v931
        %v940 = vmul.f32 %v906, %v932
        %v941 = vmul.f32 %v913, %v933
        %v942 = vmul.f32 %v920, %v934
        %v943 = vmul.f32 %v927, %v935
        %v944 = vsel %vm650, %v936, 0.0
        %v945 = vsel %vm650, %v937, 0.0
        %v946 = vadd.f32 %v944, %v945
        %v947 = vsel %vm650, %v938, 0.0
        %v948 = vadd.f32 %v946, %v947
        %v949 = vsel %vm650, %v939, 0.0
        %v950 = vadd.f32 %v948, %v949
        %v951 = vsel %vm650, %v940, 0.0
        %v952 = vadd.f32 %v950, %v951
        %v953 = vsel %vm650, %v941, 0.0
        %v954 = vadd.f32 %v952, %v953
        %v955 = vsel %vm650, %v942, 0.0
        %v956 = vadd.f32 %v954, %v955
        %v957 = vsel %vm650, %v943, 0.0
        %v958 = vadd.f32 %v956, %v957
        %v959 = vadd.f32 %v871, %v958
        %960 = vst.msk [vmem:[#allocation5] sm:$0xff] %vm650, %v959
        %961 = vst.msk [vmem:[#allocation3] sm:$0x1] %vm857, %v834
        %p962 = scmp.eq.s32.totalorder %s30, 1
        // Predicated region
        $region97: #{tpu_custom_call.1} parent=63 // pred_check
          %p963 = pneg %p962
        $region98: #{tpu_custom_call.1} parent=63 // pred_check_branch
          %965 = sbr.rel (%p963) target = $region100
        $region99: #{tpu_custom_call.1} parent=63 // pred_region
          %v966 = vld [vmem:[#allocation4] sm:$0x1]
          %v968 = vlaneseq
          %v969 = vshrl.u32 %v968, 7
          %v970 = vsub.s32 0, %v969
          %v971 = vrot.slane %v966, %v970
          %v973 = vsel %vm860, %v971, 0.0
          %v974 = vsel %vm826, %v973, 0.0
          %975 = vadd.xlane.f32.xlu0 %v974
          %v976 = vpop.xlane.xlu0 %975
          %v977 = vld [vmem:[#allocation5] sm:$0xff]
          %v978 = vrcp.pop %v976
          %v979 = vmul.f32 %v977, %v978
          %v980 = vld [vmem:[#allocation6] sm:$0xff]
          %v981 = vpack.c.bf16 %v980, %v980
          %v982 = vld [vmem:[#allocation9] sm:$0xff]
          %v983 = vpack.c.bf16 %v982, %v982
          %v984 = vpack.c.bf16 %v979, %v979
          %v985 = vld [vmem:[%s6] sm:$0xf]
          %v986 = vld [vmem:[#allocation15] sm:$0xf]
          %v987 = vld [vmem:[#allocation15 + $0x4] sm:$0xf]
          %v988 = vld [vmem:[#allocation15 + $0x8] sm:$0xf]
          %v989 = vld [vmem:[#allocation15 + $0xc] sm:$0xf]
          %v994 = vunpack.c.l.b16 %v986
          %v995 = vunpack.c.l.b16 %v987
          %v996 = vunpack.c.l.b16 %v988
          %v997 = vunpack.c.l.b16 %v989
          %v998 = vpack.c.b16 %v995, %v994
          %v999 = vpack.c.b16 %v997, %v996
          %v1003 = vsel %vm650, %v984, 0
          %1005 = vmatprep.subr.bf16.mxu0 0
          %1006 = vmatpush1.bf16.msra.mxu0 %v998
          %1007 = vmatprep.subr.bf16.mxu0 0
          %1008 = vmatpush1.bf16.msra.mxu0 %v999
          %1009 = vmatprep.subr.bf16.mxu0 0
          %1010 = vmatpush1.bf16.msra.mxu0 0
          %1011 = vmatprep.subr.bf16.mxu0 0
          %1012 = vmatpush1.bf16.msra.mxu0 0
          %1013 = vmatprep.subr.bf16.mxu0 0
          %1014 = vmatpush1.bf16.msra.mxu0 0
          %1015 = vmatprep.subr.bf16.mxu0 0
          %1016 = vmatpush1.bf16.msra.mxu0 0
          %1017 = vmatprep.subr.bf16.mxu0 0
          %1018 = vmatpush1.bf16.msra.mxu0 0
          %1019 = vmatprep.subr.bf16.mxu0 0
          %1020 = vmatpush1.bf16.msra.mxu0 0
          %1021 = vmatprep.subr.bf16.mxu0 0
          %1022 = vmatpush1.bf16.msra.mxu0 0
          %1023 = vmatprep.subr.bf16.mxu0 0
          %1024 = vmatpush1.bf16.msra.mxu0 0
          %1025 = vmatprep.subr.bf16.mxu0 0
          %1026 = vmatpush1.bf16.msra.mxu0 0
          %1027 = vmatprep.subr.bf16.mxu0 0
          %1028 = vmatpush1.bf16.msra.mxu0 0
          %1029 = vmatprep.subr.bf16.mxu0 0
          %1030 = vmatpush1.bf16.msra.mxu0 0
          %1031 = vmatprep.subr.bf16.mxu0 0
          %1032 = vmatpush1.bf16.msra.mxu0 0
          %1033 = vmatprep.subr.bf16.mxu0 0
          %1034 = vmatpush1.bf16.msra.mxu0 0
          %1035 = vmatprep.subr.bf16.mxu0 0
          %1036 = vmatpush1.bf16.msra.mxu0 0
          %1037 = vmatprep.mubr.bf16.mxu0 0
          %1038 = vmatmul.mubr.bf16.gmra.mrb[0].mxu0 %v1003
          %v1039 = vpop.f32.mrb[0].mxu0
          %v1040 = vadd.f32 0.0, %v1039
          %v1041 = vpop.f32.mrb[0].mxu0
          %v1042 = vpop.f32.mrb[0].mxu0
          %v1043 = vpop.f32.mrb[0].mxu0
          %1044 = vdwg.mxu0
          %v1046 = vsel %vm826, %v981, 0
          %vm1048 = vcmask 1043456
          %v1050 = vsel %vm1048, %v985, 0
          %1052 = vmatprep.subr.bf16.mxu0 0
          %1053 = vmatpush1.bf16.msra.mxu0 %v1050
          %1054 = vmatprep.subr.bf16.mxu0 0
          %1055 = vmatpush1.bf16.msra.mxu0 0
          %1056 = vmatprep.subr.bf16.mxu0 0
          %1057 = vmatpush1.bf16.msra.mxu0 0
          %1058 = vmatprep.subr.bf16.mxu0 0
          %1059 = vmatpush1.bf16.msra.mxu0 0
          %1060 = vmatprep.subr.bf16.mxu0 0
          %1061 = vmatpush1.bf16.msra.mxu0 0
          %1062 = vmatprep.subr.bf16.mxu0 0
          %1063 = vmatpush1.bf16.msra.mxu0 0
          %1064 = vmatprep.subr.bf16.mxu0 0
          %1065 = vmatpush1.bf16.msra.mxu0 0
          %1066 = vmatprep.subr.bf16.mxu0 0
          %1067 = vmatpush1.bf16.msra.mxu0 0
          %1068 = vmatprep.subr.bf16.mxu0 0
          %1069 = vmatpush1.bf16.msra.mxu0 0
          %1070 = vmatprep.subr.bf16.mxu0 0
          %1071 = vmatpush1.bf16.msra.mxu0 0
          %1072 = vmatprep.subr.bf16.mxu0 0
          %1073 = vmatpush1.bf16.msra.mxu0 0
          %1074 = vmatprep.subr.bf16.mxu0 0
          %1075 = vmatpush1.bf16.msra.mxu0 0
          %1076 = vmatprep.subr.bf16.mxu0 0
          %1077 = vmatpush1.bf16.msra.mxu0 0
          %1078 = vmatprep.subr.bf16.mxu0 0
          %1079 = vmatpush1.bf16.msra.mxu0 0
          %1080 = vmatprep.subr.bf16.mxu0 0
          %1081 = vmatpush1.bf16.msra.mxu0 0
          %1082 = vmatprep.subr.bf16.mxu0 0
          %1083 = vmatpush1.bf16.msra.mxu0 0
          %1084 = vmatprep.mubr.bf16.mxu0 0
          %1085 = vmatmul.mubr.bf16.gmra.mrb[0].mxu0 %v1046
          %v1086 = vpop.f32.mrb[0].mxu0
          %v1087 = vadd.f32 %v1040, %v1086
          %v1088 = vpop.f32.mrb[0].mxu0
          %v1089 = vpop.f32.mrb[0].mxu0
          %v1090 = vpop.f32.mrb[0].mxu0
          %1091 = vdwg.mxu0
          %v1092 = vld [vmem:[%s9] sm:$0x1]
          %v1094 = vlaneseq
          %v1095 = vshrl.u32 %v1094, 7
          %v1096 = vsub.s32 0, %v1095
          %v1097 = vrot.slane %v1092, %v1096
          %v1099 = vadd.f32 %v1087, %v1097
          %v1100 = vld [vmem:[#allocation16] sm:$0xf]
          %v1101 = vld [vmem:[#allocation16 + $0x4] sm:$0xf]
          %v1102 = vld [vmem:[#allocation16 + $0x8] sm:$0xf]
          %v1103 = vld [vmem:[#allocation16 + $0xc] sm:$0xf]
          %v1104 = vld [vmem:[#allocation16 + $0x10] sm:$0xf]
          %v1105 = vld [vmem:[#allocation16 + $0x14] sm:$0xf]
          %v1106 = vld [vmem:[#allocation16 + $0x18] sm:$0xf]
          %v1107 = vld [vmem:[#allocation16 + $0x1c] sm:$0xf]
          %v1108 = vld [vmem:[#allocation16 + $0x20] sm:$0xf]
          %v1109 = vld [vmem:[#allocation16 + $0x24] sm:$0xf]
          %v1110 = vld [vmem:[#allocation16 + $0x28] sm:$0xf]
          %v1111 = vld [vmem:[#allocation16 + $0x2c] sm:$0xf]
          %v1112 = vld [vmem:[#allocation16 + $0x30] sm:$0xf]
          %v1113 = vld [vmem:[#allocation16 + $0x34] sm:$0xf]
          %v1114 = vld [vmem:[#allocation16 + $0x38] sm:$0xf]
          %v1115 = vld [vmem:[#allocation16 + $0x3c] sm:$0xf]
          %v1116 = vld [vmem:[%s10] sm:$0x1]
          %v1118 = vlaneseq
          %v1119 = vshrl.u32 %v1118, 7
          %v1120 = vsub.s32 0, %v1119
          %v1121 = vrot.slane %v1116, %v1120
          %v1139 = vunpack.c.l.b16 %v1100
          %v1140 = vunpack.c.l.b16 %v1101
          %v1141 = vunpack.c.l.b16 %v1102
          %v1142 = vunpack.c.l.b16 %v1103
          %v1143 = vunpack.c.l.b16 %v1104
          %v1144 = vunpack.c.l.b16 %v1105
          %v1145 = vunpack.c.l.b16 %v1106
          %v1146 = vunpack.c.l.b16 %v1107
          %v1147 = vunpack.c.l.b16 %v1108
          %v1148 = vunpack.c.l.b16 %v1109
          %v1149 = vunpack.c.l.b16 %v1110
          %v1150 = vunpack.c.l.b16 %v1111
          %v1151 = vunpack.c.l.b16 %v1112
          %v1152 = vunpack.c.l.b16 %v1113
          %v1153 = vunpack.c.l.b16 %v1114
          %v1154 = vunpack.c.l.b16 %v1115
          %v1155 = vpack.c.b16 %v1140, %v1139
          %v1156 = vpack.c.b16 %v1142, %v1141
          %v1157 = vpack.c.b16 %v1144, %v1143
          %v1158 = vpack.c.b16 %v1146, %v1145
          %v1159 = vpack.c.b16 %v1148, %v1147
          %v1160 = vpack.c.b16 %v1150, %v1149
          %v1161 = vpack.c.b16 %v1152, %v1151
          %v1162 = vpack.c.b16 %v1154, %v1153
          %1171 = vmatprep.subr.bf16.mxu0 0
          %1172 = vmatpush1.bf16.msra.mxu0 %v1155
          %1173 = vmatprep.subr.bf16.mxu0 0
          %1174 = vmatpush1.bf16.msra.mxu0 %v1156
          %1175 = vmatprep.subr.bf16.mxu0 0
          %1176 = vmatpush1.bf16.msra.mxu0 %v1157
          %1177 = vmatprep.subr.bf16.mxu0 0
          %1178 = vmatpush1.bf16.msra.mxu0 %v1158
          %1179 = vmatprep.subr.bf16.mxu0 0
          %1180 = vmatpush1.bf16.msra.mxu0 %v1159
          %1181 = vmatprep.subr.bf16.mxu0 0
          %1182 = vmatpush1.bf16.msra.mxu0 %v1160
          %1183 = vmatprep.subr.bf16.mxu0 0
          %1184 = vmatpush1.bf16.msra.mxu0 %v1161
          %1185 = vmatprep.subr.bf16.mxu0 0
          %1186 = vmatpush1.bf16.msra.mxu0 %v1162
          %1187 = vmatprep.subr.bf16.mxu0 0
          %1188 = vmatpush1.bf16.msra.mxu0 0
          %1189 = vmatprep.subr.bf16.mxu0 0
          %1190 = vmatpush1.bf16.msra.mxu0 0
          %1191 = vmatprep.subr.bf16.mxu0 0
          %1192 = vmatpush1.bf16.msra.mxu0 0
          %1193 = vmatprep.subr.bf16.mxu0 0
          %1194 = vmatpush1.bf16.msra.mxu0 0
          %1195 = vmatprep.subr.bf16.mxu0 0
          %1196 = vmatpush1.bf16.msra.mxu0 0
          %1197 = vmatprep.subr.bf16.mxu0 0
          %1198 = vmatpush1.bf16.msra.mxu0 0
          %1199 = vmatprep.subr.bf16.mxu0 0
          %1200 = vmatpush1.bf16.msra.mxu0 0
          %1201 = vmatprep.subr.bf16.mxu0 0
          %1202 = vmatpush1.bf16.msra.mxu0 0
          %1203 = vmatprep.mubr.bf16.mxu0 0
          %1204 = vmatmul.mubr.bf16.gmra.mrb[0].mxu0 %v983
          %v1205 = vpop.f32.mrb[0].mxu0
          %v1206 = vadd.f32 %v1121, %v1205
          %v1207 = vpop.f32.mrb[0].mxu0
          %v1208 = vpop.f32.mrb[0].mxu0
          %v1209 = vpop.f32.mrb[0].mxu0
          %1210 = vdwg.mxu0
          %v1211 = vadd.f32 %v1099, %v1206
          %v1212 = vxor.u32 %v1211, 2147483648
          %v1213 = vmul.f32 %v1212, 1.442695
          %v1214 = vpow.pop %v1213
          %v1215 = vadd.f32 %v1214, 1.0
          %v1216 = vrcp.pop %v1215
          %v1217 = vmul.f32 1.0, %v1216
          %s1218 = scalar_lea.vmem %s6, 4
          %v1219 = vld [vmem:[%s1218] sm:$0xf]
          %s1220 = scalar_lea.vmem [#allocation15], 16
          %v1221 = vld [vmem:[%s1220] sm:$0xf]
          %v1222 = vld [vmem:[%s1220 + $0x4] sm:$0xf]
          %v1223 = vld [vmem:[%s1220 + $0x8] sm:$0xf]
          %v1224 = vld [vmem:[%s1220 + $0xc] sm:$0xf]
          %v1229 = vunpack.c.l.b16 %v1221
          %v1230 = vunpack.c.l.b16 %v1222
          %v1231 = vunpack.c.l.b16 %v1223
          %v1232 = vunpack.c.l.b16 %v1224
          %v1233 = vpack.c.b16 %v1230, %v1229
          %v1234 = vpack.c.b16 %v1232, %v1231
          %1237 = vmatprep.subr.bf16.mxu0 0
          %1238 = vmatpush1.bf16.msra.mxu0 %v1233
          %1239 = vmatprep.subr.bf16.mxu0 0
          %1240 = vmatpush1.bf16.msra.mxu0 %v1234
          %1241 = vmatprep.subr.bf16.mxu0 0
          %1242 = vmatpush1.bf16.msra.mxu0 0
          %1243 = vmatprep.subr.bf16.mxu0 0
          %1244 = vmatpush1.bf16.msra.mxu0 0
          %1245 = vmatprep.subr.bf16.mxu0 0
          %1246 = vmatpush1.bf16.msra.mxu0 0
          %1247 = vmatprep.subr.bf16.mxu0 0
          %1248 = vmatpush1.bf16.msra.mxu0 0
          %1249 = vmatprep.subr.bf16.mxu0 0
          %1250 = vmatpush1.bf16.msra.mxu0 0
          %1251 = vmatprep.subr.bf16.mxu0 0
          %1252 = vmatpush1.bf16.msra.mxu0 0
          %1253 = vmatprep.subr.bf16.mxu0 0
          %1254 = vmatpush1.bf16.msra.mxu0 0
          %1255 = vmatprep.subr.bf16.mxu0 0
          %1256 = vmatpush1.bf16.msra.mxu0 0
          %1257 = vmatprep.subr.bf16.mxu0 0
          %1258 = vmatpush1.bf16.msra.mxu0 0
          %1259 = vmatprep.subr.bf16.mxu0 0
          %1260 = vmatpush1.bf16.msra.mxu0 0
          %1261 = vmatprep.subr.bf16.mxu0 0
          %1262 = vmatpush1.bf16.msra.mxu0 0
          %1263 = vmatprep.subr.bf16.mxu0 0
          %1264 = vmatpush1.bf16.msra.mxu0 0
          %1265 = vmatprep.subr.bf16.mxu0 0
          %1266 = vmatpush1.bf16.msra.mxu0 0
          %1267 = vmatprep.subr.bf16.mxu0 0
          %1268 = vmatpush1.bf16.msra.mxu0 0
          %1269 = vmatprep.mubr.bf16.mxu0 0
          %1270 = vmatmul.mubr.bf16.gmra.mrb[0].mxu0 %v1003
          %v1271 = vpop.f32.mrb[0].mxu0
          %v1272 = vadd.f32 0.0, %v1271
          %v1273 = vpop.f32.mrb[0].mxu0
          %v1274 = vpop.f32.mrb[0].mxu0
          %v1275 = vpop.f32.mrb[0].mxu0
          %1276 = vdwg.mxu0
          %v1278 = vsel %vm1048, %v1219, 0
          %1280 = vmatprep.subr.bf16.mxu0 0
          %1281 = vmatpush1.bf16.msra.mxu0 %v1278
          %1282 = vmatprep.subr.bf16.mxu0 0
          %1283 = vmatpush1.bf16.msra.mxu0 0
          %1284 = vmatprep.subr.bf16.mxu0 0
          %1285 = vmatpush1.bf16.msra.mxu0 0
          %1286 = vmatprep.subr.bf16.mxu0 0
          %1287 = vmatpush1.bf16.msra.mxu0 0
          %1288 = vmatprep.subr.bf16.mxu0 0
          %1289 = vmatpush1.bf16.msra.mxu0 0
          %1290 = vmatprep.subr.bf16.mxu0 0
          %1291 = vmatpush1.bf16.msra.mxu0 0
          %1292 = vmatprep.subr.bf16.mxu0 0
          %1293 = vmatpush1.bf16.msra.mxu0 0
          %1294 = vmatprep.subr.bf16.mxu0 0
          %1295 = vmatpush1.bf16.msra.mxu0 0
          %1296 = vmatprep.subr.bf16.mxu0 0
          %1297 = vmatpush1.bf16.msra.mxu0 0
          %1298 = vmatprep.subr.bf16.mxu0 0
          %1299 = vmatpush1.bf16.msra.mxu0 0
          %1300 = vmatprep.subr.bf16.mxu0 0
          %1301 = vmatpush1.bf16.msra.mxu0 0
          %1302 = vmatprep.subr.bf16.mxu0 0
          %1303 = vmatpush1.bf16.msra.mxu0 0
          %1304 = vmatprep.subr.bf16.mxu0 0
          %1305 = vmatpush1.bf16.msra.mxu0 0
          %1306 = vmatprep.subr.bf16.mxu0 0
          %1307 = vmatpush1.bf16.msra.mxu0 0
          %1308 = vmatprep.subr.bf16.mxu0 0
          %1309 = vmatpush1.bf16.msra.mxu0 0
          %1310 = vmatprep.subr.bf16.mxu0 0
          %1311 = vmatpush1.bf16.msra.mxu0 0
          %1312 = vmatprep.mubr.bf16.mxu0 0
          %1313 = vmatmul.mubr.bf16.gmra.mrb[0].mxu0 %v1046
          %v1314 = vpop.f32.mrb[0].mxu0
          %v1315 = vadd.f32 %v1272, %v1314
          %v1316 = vpop.f32.mrb[0].mxu0
          %v1317 = vpop.f32.mrb[0].mxu0
          %v1318 = vpop.f32.mrb[0].mxu0
          %1319 = vdwg.mxu0
          %s1320 = scalar_lea.vmem %s9, 1
          %v1321 = vld [vmem:[%s1320] sm:$0x1]
          %v1323 = vlaneseq
          %v1324 = vshrl.u32 %v1323, 7
          %v1325 = vsub.s32 0, %v1324
          %v1326 = vrot.slane %v1321, %v1325
          %v1328 = vadd.f32 %v1315, %v1326
          %s1329 = scalar_lea.vmem [#allocation16], 64
          %v1330 = vld [vmem:[%s1329] sm:$0xf]
          %v1331 = vld [vmem:[%s1329 + $0x4] sm:$0xf]
          %v1332 = vld [vmem:[%s1329 + $0x8] sm:$0xf]
          %v1333 = vld [vmem:[%s1329 + $0xc] sm:$0xf]
          %v1334 = vld [vmem:[%s1329 + $0x10] sm:$0xf]
          %v1335 = vld [vmem:[%s1329 + $0x14] sm:$0xf]
          %v1336 = vld [vmem:[%s1329 + $0x18] sm:$0xf]
          %v1337 = vld [vmem:[%s1329 + $0x1c] sm:$0xf]
          %v1338 = vld [vmem:[%s1329 + $0x20] sm:$0xf]
          %v1339 = vld [vmem:[%s1329 + $0x24] sm:$0xf]
          %v1340 = vld [vmem:[%s1329 + $0x28] sm:$0xf]
          %v1341 = vld [vmem:[%s1329 + $0x2c] sm:$0xf]
          %v1342 = vld [vmem:[%s1329 + $0x30] sm:$0xf]
          %v1343 = vld [vmem:[%s1329 + $0x34] sm:$0xf]
          %v1344 = vld [vmem:[%s1329 + $0x38] sm:$0xf]
          %v1345 = vld [vmem:[%s1329 + $0x3c] sm:$0xf]
          %s1346 = scalar_lea.vmem %s10, 1
          %v1347 = vld [vmem:[%s1346] sm:$0x1]
          %v1349 = vlaneseq
          %v1350 = vshrl.u32 %v1349, 7
          %v1351 = vsub.s32 0, %v1350
          %v1352 = vrot.slane %v1347, %v1351
          %v1370 = vunpack.c.l.b16 %v1330
          %v1371 = vunpack.c.l.b16 %v1331
          %v1372 = vunpack.c.l.b16 %v1332
          %v1373 = vunpack.c.l.b16 %v1333
          %v1374 = vunpack.c.l.b16 %v1334
          %v1375 = vunpack.c.l.b16 %v1335
          %v1376 = vunpack.c.l.b16 %v1336
          %v1377 = vunpack.c.l.b16 %v1337
          %v1378 = vunpack.c.l.b16 %v1338
          %v1379 = vunpack.c.l.b16 %v1339
          %v1380 = vunpack.c.l.b16 %v1340
          %v1381 = vunpack.c.l.b16 %v1341
          %v1382 = vunpack.c.l.b16 %v1342
          %v1383 = vunpack.c.l.b16 %v1343
          %v1384 = vunpack.c.l.b16 %v1344
          %v1385 = vunpack.c.l.b16 %v1345
          %v1386 = vpack.c.b16 %v1371, %v1370
          %v1387 = vpack.c.b16 %v1373, %v1372
          %v1388 = vpack.c.b16 %v1375, %v1374
          %v1389 = vpack.c.b16 %v1377, %v1376
          %v1390 = vpack.c.b16 %v1379, %v1378
          %v1391 = vpack.c.b16 %v1381, %v1380
          %v1392 = vpack.c.b16 %v1383, %v1382
          %v1393 = vpack.c.b16 %v1385, %v1384
          %1402 = vmatprep.subr.bf16.mxu0 0
          %1403 = vmatpush1.bf16.msra.mxu0 %v1386
          %1404 = vmatprep.subr.bf16.mxu0 0
          %1405 = vmatpush1.bf16.msra.mxu0 %v1387
          %1406 = vmatprep.subr.bf16.mxu0 0
          %1407 = vmatpush1.bf16.msra.mxu0 %v1388
          %1408 = vmatprep.subr.bf16.mxu0 0
          %1409 = vmatpush1.bf16.msra.mxu0 %v1389
          %1410 = vmatprep.subr.bf16.mxu0 0
          %1411 = vmatpush1.bf16.msra.mxu0 %v1390
          %1412 = vmatprep.subr.bf16.mxu0 0
          %1413 = vmatpush1.bf16.msra.mxu0 %v1391
          %1414 = vmatprep.subr.bf16.mxu0 0
          %1415 = vmatpush1.bf16.msra.mxu0 %v1392
          %1416 = vmatprep.subr.bf16.mxu0 0
          %1417 = vmatpush1.bf16.msra.mxu0 %v1393
          %1418 = vmatprep.subr.bf16.mxu0 0
          %1419 = vmatpush1.bf16.msra.mxu0 0
          %1420 = vmatprep.subr.bf16.mxu0 0
          %1421 = vmatpush1.bf16.msra.mxu0 0
          %1422 = vmatprep.subr.bf16.mxu0 0
          %1423 = vmatpush1.bf16.msra.mxu0 0
          %1424 = vmatprep.subr.bf16.mxu0 0
          %1425 = vmatpush1.bf16.msra.mxu0 0
          %1426 = vmatprep.subr.bf16.mxu0 0
          %1427 = vmatpush1.bf16.msra.mxu0 0
          %1428 = vmatprep.subr.bf16.mxu0 0
          %1429 = vmatpush1.bf16.msra.mxu0 0
          %1430 = vmatprep.subr.bf16.mxu0 0
          %1431 = vmatpush1.bf16.msra.mxu0 0
          %1432 = vmatprep.subr.bf16.mxu0 0
          %1433 = vmatpush1.bf16.msra.mxu0 0
          %1434 = vmatprep.mubr.bf16.mxu0 0
          %1435 = vmatmul.mubr.bf16.gmra.mrb[0].mxu0 %v983
          %v1436 = vpop.f32.mrb[0].mxu0
          %v1437 = vadd.f32 %v1352, %v1436
          %v1438 = vpop.f32.mrb[0].mxu0
          %v1439 = vpop.f32.mrb[0].mxu0
          %v1440 = vpop.f32.mrb[0].mxu0
          %1441 = vdwg.mxu0
          %v1442 = vadd.f32 %v1328, %v1437
          %v1443 = vxor.u32 %v1442, 2147483648
          %v1444 = vmul.f32 %v1443, 1.442695
          %v1445 = vpow.pop %v1444
          %v1446 = vadd.f32 %v1445, 1.0
          %v1447 = vrcp.pop %v1446
          %v1448 = vmul.f32 1.0, %v1447
          %s1449 = scalar_lea.vmem %s6, 8
          %v1450 = vld [vmem:[%s1449] sm:$0xf]
          %s1451 = scalar_lea.vmem [#allocation15], 32
          %v1452 = vld [vmem:[%s1451] sm:$0xf]
          %v1453 = vld [vmem:[%s1451 + $0x4] sm:$0xf]
          %v1454 = vld [vmem:[%s1451 + $0x8] sm:$0xf]
          %v1455 = vld [vmem:[%s1451 + $0xc] sm:$0xf]
          %v1460 = vunpack.c.l.b16 %v1452
          %v1461 = vunpack.c.l.b16 %v1453
          %v1462 = vunpack.c.l.b16 %v1454
          %v1463 = vunpack.c.l.b16 %v1455
          %v1464 = vpack.c.b16 %v1461, %v1460
          %v1465 = vpack.c.b16 %v1463, %v1462
          %1468 = vmatprep.subr.bf16.mxu0 0
          %1469 = vmatpush1.bf16.msra.mxu0 %v1464
          %1470 = vmatprep.subr.bf16.mxu0 0
          %1471 = vmatpush1.bf16.msra.mxu0 %v1465
          %1472 = vmatprep.subr.bf16.mxu0 0
          %1473 = vmatpush1.bf16.msra.mxu0 0
          %1474 = vmatprep.subr.bf16.mxu0 0
          %1475 = vmatpush1.bf16.msra.mxu0 0
          %1476 = vmatprep.subr.bf16.mxu0 0
          %1477 = vmatpush1.bf16.msra.mxu0 0
          %1478 = vmatprep.subr.bf16.mxu0 0
          %1479 = vmatpush1.bf16.msra.mxu0 0
          %1480 = vmatprep.subr.bf16.mxu0 0
          %1481 = vmatpush1.bf16.msra.mxu0 0
          %1482 = vmatprep.subr.bf16.mxu0 0
          %1483 = vmatpush1.bf16.msra.mxu0 0
          %1484 = vmatprep.subr.bf16.mxu0 0
          %1485 = vmatpush1.bf16.msra.mxu0 0
          %1486 = vmatprep.subr.bf16.mxu0 0
          %1487 = vmatpush1.bf16.msra.mxu0 0
          %1488 = vmatprep.subr.bf16.mxu0 0
          %1489 = vmatpush1.bf16.msra.mxu0 0
          %1490 = vmatprep.subr.bf16.mxu0 0
          %1491 = vmatpush1.bf16.msra.mxu0 0
          %1492 = vmatprep.subr.bf16.mxu0 0
          %1493 = vmatpush1.bf16.msra.mxu0 0
          %1494 = vmatprep.subr.bf16.mxu0 0
          %1495 = vmatpush1.bf16.msra.mxu0 0
          %1496 = vmatprep.subr.bf16.mxu0 0
          %1497 = vmatpush1.bf16.msra.mxu0 0
          %1498 = vmatprep.subr.bf16.mxu0 0
          %1499 = vmatpush1.bf16.msra.mxu0 0
          %1500 = vmatprep.mubr.bf16.mxu0 0
          %1501 = vmatmul.mubr.bf16.gmra.mrb[0].mxu0 %v1003
          %v1502 = vpop.f32.mrb[0].mxu0
          %v1503 = vadd.f32 0.0, %v1502
          %v1504 = vpop.f32.mrb[0].mxu0
          %v1505 = vpop.f32.mrb[0].mxu0
          %v1506 = vpop.f32.mrb[0].mxu0
          %1507 = vdwg.mxu0
          %v1509 = vsel %vm1048, %v1450, 0
          %1511 = vmatprep.subr.bf16.mxu0 0
          %1512 = vmatpush1.bf16.msra.mxu0 %v1509
          %1513 = vmatprep.subr.bf16.mxu0 0
          %1514 = vmatpush1.bf16.msra.mxu0 0
          %1515 = vmatprep.subr.bf16.mxu0 0
          %1516 = vmatpush1.bf16.msra.mxu0 0
          %1517 = vmatprep.subr.bf16.mxu0 0
          %1518 = vmatpush1.bf16.msra.mxu0 0
          %1519 = vmatprep.subr.bf16.mxu0 0
          %1520 = vmatpush1.bf16.msra.mxu0 0
          %1521 = vmatprep.subr.bf16.mxu0 0
          %1522 = vmatpush1.bf16.msra.mxu0 0
          %1523 = vmatprep.subr.bf16.mxu0 0
          %1524 = vmatpush1.bf16.msra.mxu0 0
          %1525 = vmatprep.subr.bf16.mxu0 0
          %1526 = vmatpush1.bf16.msra.mxu0 0
          %1527 = vmatprep.subr.bf16.mxu0 0
          %1528 = vmatpush1.bf16.msra.mxu0 0
          %1529 = vmatprep.subr.bf16.mxu0 0
          %1530 = vmatpush1.bf16.msra.mxu0 0
          %1531 = vmatprep.subr.bf16.mxu0 0
          %1532 = vmatpush1.bf16.msra.mxu0 0
          %1533 = vmatprep.subr.bf16.mxu0 0
          %1534 = vmatpush1.bf16.msra.mxu0 0
          %1535 = vmatprep.subr.bf16.mxu0 0
          %1536 = vmatpush1.bf16.msra.mxu0 0
          %1537 = vmatprep.subr.bf16.mxu0 0
          %1538 = vmatpush1.bf16.msra.mxu0 0
          %1539 = vmatprep.subr.bf16.mxu0 0
          %1540 = vmatpush1.bf16.msra.mxu0 0
          %1541 = vmatprep.subr.bf16.mxu0 0
          %1542 = vmatpush1.bf16.msra.mxu0 0
          %1543 = vmatprep.mubr.bf16.mxu0 0
          %1544 = vmatmul.mubr.bf16.gmra.mrb[0].mxu0 %v1046
          %v1545 = vpop.f32.mrb[0].mxu0
          %v1546 = vadd.f32 %v1503, %v1545
          %v1547 = vpop.f32.mrb[0].mxu0
          %v1548 = vpop.f32.mrb[0].mxu0
          %v1549 = vpop.f32.mrb[0].mxu0
          %1550 = vdwg.mxu0
          %s1551 = scalar_lea.vmem %s9, 2
          %v1552 = vld [vmem:[%s1551] sm:$0x1]
          %v1554 = vlaneseq
          %v1555 = vshrl.u32 %v1554, 7
          %v1556 = vsub.s32 0, %v1555
          %v1557 = vrot.slane %v1552, %v1556
          %v1559 = vadd.f32 %v1546, %v1557
          %s1560 = scalar_lea.vmem [#allocation16], 128
          %v1561 = vld [vmem:[%s1560] sm:$0xf]
          %v1562 = vld [vmem:[%s1560 + $0x4] sm:$0xf]
          %v1563 = vld [vmem:[%s1560 + $0x8] sm:$0xf]
          %v1564 = vld [vmem:[%s1560 + $0xc] sm:$0xf]
          %v1565 = vld [vmem:[%s1560 + $0x10] sm:$0xf]
          %v1566 = vld [vmem:[%s1560 + $0x14] sm:$0xf]
          %v1567 = vld [vmem:[%s1560 + $0x18] sm:$0xf]
          %v1568 = vld [vmem:[%s1560 + $0x1c] sm:$0xf]
          %v1569 = vld [vmem:[%s1560 + $0x20] sm:$0xf]
          %v1570 = vld [vmem:[%s1560 + $0x24] sm:$0xf]
          %v1571 = vld [vmem:[%s1560 + $0x28] sm:$0xf]
          %v1572 = vld [vmem:[%s1560 + $0x2c] sm:$0xf]
          %v1573 = vld [vmem:[%s1560 + $0x30] sm:$0xf]
          %v1574 = vld [vmem:[%s1560 + $0x34] sm:$0xf]
          %v1575 = vld [vmem:[%s1560 + $0x38] sm:$0xf]
          %v1576 = vld [vmem:[%s1560 + $0x3c] sm:$0xf]
          %s1577 = scalar_lea.vmem %s10, 2
          %v1578 = vld [vmem:[%s1577] sm:$0x1]
          %v1580 = vlaneseq
          %v1581 = vshrl.u32 %v1580, 7
          %v1582 = vsub.s32 0, %v1581
          %v1583 = vrot.slane %v1578, %v1582
          %v1601 = vunpack.c.l.b16 %v1561
          %v1602 = vunpack.c.l.b16 %v1562
          %v1603 = vunpack.c.l.b16 %v1563
          %v1604 = vunpack.c.l.b16 %v1564
          %v1605 = vunpack.c.l.b16 %v1565
          %v1606 = vunpack.c.l.b16 %v1566
          %v1607 = vunpack.c.l.b16 %v1567
          %v1608 = vunpack.c.l.b16 %v1568
          %v1609 = vunpack.c.l.b16 %v1569
          %v1610 = vunpack.c.l.b16 %v1570
          %v1611 = vunpack.c.l.b16 %v1571
          %v1612 = vunpack.c.l.b16 %v1572
          %v1613 = vunpack.c.l.b16 %v1573
          %v1614 = vunpack.c.l.b16 %v1574
          %v1615 = vunpack.c.l.b16 %v1575
          %v1616 = vunpack.c.l.b16 %v1576
          %v1617 = vpack.c.b16 %v1602, %v1601
          %v1618 = vpack.c.b16 %v1604, %v1603
          %v1619 = vpack.c.b16 %v1606, %v1605
          %v1620 = vpack.c.b16 %v1608, %v1607
          %v1621 = vpack.c.b16 %v1610, %v1609
          %v1622 = vpack.c.b16 %v1612, %v1611
          %v1623 = vpack.c.b16 %v1614, %v1613
          %v1624 = vpack.c.b16 %v1616, %v1615
          %1633 = vmatprep.subr.bf16.mxu0 0
          %1634 = vmatpush1.bf16.msra.mxu0 %v1617
          %1635 = vmatprep.subr.bf16.mxu0 0
          %1636 = vmatpush1.bf16.msra.mxu0 %v1618
          %1637 = vmatprep.subr.bf16.mxu0 0
          %1638 = vmatpush1.bf16.msra.mxu0 %v1619
          %1639 = vmatprep.subr.bf16.mxu0 0
          %1640 = vmatpush1.bf16.msra.mxu0 %v1620
          %1641 = vmatprep.subr.bf16.mxu0 0
          %1642 = vmatpush1.bf16.msra.mxu0 %v1621
          %1643 = vmatprep.subr.bf16.mxu0 0
          %1644 = vmatpush1.bf16.msra.mxu0 %v1622
          %1645 = vmatprep.subr.bf16.mxu0 0
          %1646 = vmatpush1.bf16.msra.mxu0 %v1623
          %1647 = vmatprep.subr.bf16.mxu0 0
          %1648 = vmatpush1.bf16.msra.mxu0 %v1624
          %1649 = vmatprep.subr.bf16.mxu0 0
          %1650 = vmatpush1.bf16.msra.mxu0 0
          %1651 = vmatprep.subr.bf16.mxu0 0
          %1652 = vmatpush1.bf16.msra.mxu0 0
          %1653 = vmatprep.subr.bf16.mxu0 0
          %1654 = vmatpush1.bf16.msra.mxu0 0
          %1655 = vmatprep.subr.bf16.mxu0 0
          %1656 = vmatpush1.bf16.msra.mxu0 0
          %1657 = vmatprep.subr.bf16.mxu0 0
          %1658 = vmatpush1.bf16.msra.mxu0 0
          %1659 = vmatprep.subr.bf16.mxu0 0
          %1660 = vmatpush1.bf16.msra.mxu0 0
          %1661 = vmatprep.subr.bf16.mxu0 0
          %1662 = vmatpush1.bf16.msra.mxu0 0
          %1663 = vmatprep.subr.bf16.mxu0 0
          %1664 = vmatpush1.bf16.msra.mxu0 0
          %1665 = vmatprep.mubr.bf16.mxu0 0
          %1666 = vmatmul.mubr.bf16.gmra.mrb[0].mxu0 %v983
          %v1667 = vpop.f32.mrb[0].mxu0
          %v1668 = vadd.f32 %v1583, %v1667
          %v1669 = vpop.f32.mrb[0].mxu0
          %v1670 = vpop.f32.mrb[0].mxu0
          %v1671 = vpop.f32.mrb[0].mxu0
          %1672 = vdwg.mxu0
          %v1673 = vmul.f32 %v1217, %v1668
          %v1674 = vadd.f32 %v1559, %v1673
          %v1675 = vtanh.pop %v1674
          %v1676 = vsub.f32 1.0, %v1448
          %v1677 = vmul.f32 %v1676, %v1675
          %v1678 = vmul.f32 %v1448, %v982
          %v1679 = vadd.f32 %v1677, %v1678
          %1680 = vst [vmem:[#allocation18] sm:$0xff] %v1679
          %1681 = vst.msk [vmem:[#allocation19] sm:$0xff] %vm650, %v979
        $region100: #{tpu_custom_call.1} parent=63 // pred_fallthru
          _
        // Predicated region
        $region101: #{tpu_custom_call.1} parent=63 // pred_check
          %p1682 = pneg %p279
        $region102: #{tpu_custom_call.1} parent=63 // pred_check_branch
          %1684 = sbr.rel (%p1682) target = $region104
        $region103: #{tpu_custom_call.1} parent=63 // pred_region
          %s1686 = ssub.s32 128, 128
          %1687 = vsyncadd [#allocation8], %s1686
          %s1689 = sshll.u32 [#allocation18], 4
          %s1690 = int_to_ptr.vmem [resolvable:$true] %s1689
          %1692 = dma.vmem_to_hbm [thread:$0]  %s1690, 128, %s11, [#allocation8]
        $region104: #{tpu_custom_call.1} parent=63 // pred_fallthru
          _
        // Predicated region
        $region105: #{tpu_custom_call.1} parent=63 // pred_check
          %p1693 = pneg %p300
        $region106: #{tpu_custom_call.1} parent=63 // pred_check_branch
          %1695 = sbr.rel (%p1693) target = $region108
        $region107: #{tpu_custom_call.1} parent=63 // pred_region
          %s1697 = ssub.s32 128, 128
          %1698 = vsyncadd [#allocation20], %s1697
          %s1700 = sshll.u32 [#allocation19], 4
          %s1701 = int_to_ptr.vmem [resolvable:$true] %s1700
          %1703 = dma.vmem_to_hbm [thread:$0]  %s1701, 128, %s12, [#allocation20]
        $region108: #{tpu_custom_call.1} parent=63 // pred_fallthru
          _
        // Predicated region
        $region109: #{tpu_custom_call.1} parent=63 // pred_check
          %p1704 = pneg %p279
        $region110: #{tpu_custom_call.1} parent=63 // pred_check_branch
          %1706 = sbr.rel (%p1704) target = $region112
        $region111: #{tpu_custom_call.1} parent=63 // pred_region
          %1707 = dma.done [#allocation8], 128
        $region112: #{tpu_custom_call.1} parent=63 // pred_fallthru
          _
        // Predicated region
        $region113: #{tpu_custom_call.1} parent=63 // pred_check
          %p1708 = pneg %p300
        $region114: #{tpu_custom_call.1} parent=63 // pred_check_branch
          %1710 = sbr.rel (%p1708) target = $region116
        $region115: #{tpu_custom_call.1} parent=63 // pred_region
          %1711 = dma.done [#allocation20], 128
        $region116: #{tpu_custom_call.1} parent=63 // pred_fallthru
          _
      $region64: #{tpu_custom_call.1} parent=5 // pred_fallthru
        _
      %p1712 = scmp.le.s32.totalorder 2, %s25
      // Predicated region
      $region117: #{tpu_custom_call.1} parent=5 // pred_check
        %p1713 = pneg %p1712
      $region118: #{tpu_custom_call.1} parent=5 // pred_check_branch
        %1715 = sbr.rel (%p1713) target = $region120
      $region119: #{tpu_custom_call.1} parent=5 // pred_region
        %s1716 = ssub.s32 %s25, 2
      $region120: #{tpu_custom_call.1} parent=5 // pred_fallthru
        _
    $region6: #{tpu_custom_call.1} parent=1 // loop_footer
      %s29 = sadd.s32 1, %s25
    $region7: #{tpu_custom_call.1} parent=1 // loop_footer_branch
      %24 = sbr.rel target = $region3
    $region8: #{tpu_custom_call.1} parent=1 // loop_exit
      _
    %1717 = vsyncpa [#allocation7], 1
    %s1718 = scalar_lea.sflag [#allocation7], 1
    %1719 = vsyncpa %s1718, 1
    %1720 = vsyncpa [#allocation10], 1
    %1721 = vsyncpa [#allocation14], 1
    %1722 = vsyncpa [#allocation17], 1
    %1723 = vsyncpa [#allocation8], 1
    %s1724 = scalar_lea.sflag [#allocation8], 1
    %1725 = vsyncpa %s1724, 1
    %1726 = vsyncpa [#allocation20], 1

</llo_original>
